<compile_context>
chip_gen: v6e
topology: v6e:2x2x1
jax: 0.10.0
libtpu: 0.0.40
codegen_flags: <defaults>
</compile_context>

<pallas_src>
import functools

import jax
import jax.numpy as jnp
import numpy as np
from jax.experimental import pallas as pl
from jax.experimental.pallas import tpu as pltpu

EPS = 1e-4
NEG_SLOPE = 0.2


# ---------------------------------------------------------------------------
# Fused kernel:
#   y = LeakyReLU( conv3_1x1(x) + BN2(conv2_3x3( LeakyReLU(BN1(conv1_3x3(x))) )) )
# ---------------------------------------------------------------------------
def resblock_kernel(x_ref, band1_ref, band2_ref, skipw_ref,
                    g1_ref, b1_ref, g2_ref, b2_ref,
                    out_ref, xpad_ref, hpad_ref, *, width):
    N, H, WCin = x_ref.shape
    NH = N * H
    WCout = out_ref.shape[-1]
    W = width
    Cout = WCout // W
    inv_n = 1.0 / float(NH * W)          # 1 / (N*H*W)

    def leaky(v):
        return jnp.where(v > 0, v, NEG_SLOPE * v)

    def lane_group_allsum(v):
        """(1, W*Cout) -> (1, W*Cout): every lane ends up holding the sum of its channel
        over all W lane-groups.  Exact, runs on the XLU (roll) / VPU (add), no MXU."""
        if W & (W - 1) == 0:             # W is a power of two: wrap-around roll tree
            step = Cout
            while step < WCout:
                v = v + pltpu.roll(v, shift=step, axis=1)
                step *= 2
            return v
        # general W: explicit fold over the W lane groups, then re-broadcast by concat
        tot = v[:, 0:Cout]
        for w in range(1, W):
            tot = tot + v[:, w * Cout:(w + 1) * Cout]
        return jnp.concatenate([tot] * W, axis=1)

    def batchnorm(acc, gamma_l, beta_l):
        # training-mode BN, two-pass (exact) stats; gamma/beta arrive pre-tiled (1, W*Cout).
        s = jnp.sum(acc, axis=0, keepdims=True)            # (1, W*Cout) per-(w,c) sums
        mean_l = lane_group_allsum(s) * inv_n              # per-channel mean, replicated
        d = acc - mean_l
        ss = jnp.sum(d * d, axis=0, keepdims=True)
        var_l = lane_group_allsum(ss) * inv_n              # biased variance, replicated
        scale_l = gamma_l * jax.lax.rsqrt(var_l + EPS)
        shift_l = beta_l - mean_l * scale_l
        return acc * scale_l + shift_l

    def conv3x3(src_pad_ref, band_ref, cin_lanes):
        # SAME 3x3 conv = 3 height-taps; each tap is a contiguous row slab matmul'd
        # against a block-Toeplitz band that folds the W-shifts + W zero-padding.
        # The dy=0 tap initialises the accumulator directly (no zero-materialise + add).
        rows0 = src_pad_ref[:, 0:H, :].reshape(NH, cin_lanes)
        acc = jnp.dot(rows0, band_ref[0], preferred_element_type=jnp.float32)
        for dy in (1, 2):
            rows = src_pad_ref[:, dy:dy + H, :].reshape(NH, cin_lanes)
            acc = acc + jnp.dot(rows, band_ref[dy],
                                preferred_element_type=jnp.float32)
        return acc

    # ---- height-halo copy of x: zero ONLY the two halo rows, write interior once ----
    xpad_ref[:, 0:1, :] = jnp.zeros((N, 1, WCin), jnp.float32)
    xpad_ref[:, H + 1:H + 2, :] = jnp.zeros((N, 1, WCin), jnp.float32)
    xpad_ref[:, 1:H + 1, :] = x_ref[...]

    # ---- 1x1 skip path (independent of conv1/conv2; the scheduler interleaves it) ----
    skip = jnp.dot(x_ref[...].reshape(NH, WCin), skipw_ref[...],
                   preferred_element_type=jnp.float32)             # (NH, W*Cout)

    # ---- conv1 -> BN1 -> LeakyReLU (lane-dense (N*H, W*Cout) layout) ----
    h = leaky(batchnorm(conv3x3(xpad_ref, band1_ref, WCin),
                        g1_ref[...], b1_ref[...]))

    # ---- height-halo copy of h (h never leaves VMEM); halo-only zeroing ----
    hpad_ref[:, 0:1, :] = jnp.zeros((N, 1, WCout), jnp.float32)
    hpad_ref[:, H + 1:H + 2, :] = jnp.zeros((N, 1, WCout), jnp.float32)
    hpad_ref[:, 1:H + 1, :] = h.reshape(N, H, WCout)

    # ---- conv2 -> BN2, add skip, final LeakyReLU; lane-dense output store ----
    out_ref[...] = leaky(skip + batchnorm(conv3x3(hpad_ref, band2_ref, WCout),
                                          g2_ref[...], b2_ref[...]))


# ---------------------------------------------------------------------------
# Wrapper-side weight folding (tiny, pure XLA, runs once per call under jit)
# ---------------------------------------------------------------------------
def _band_from_3x3(w_kkio, width):
    """Fold a (3, 3, Cin, Cout) HWIO kernel into 3 block-Toeplitz width-bands.

    band[dy, wi*Cin + ci, wo*Cout + co] = w[dy, wi - wo + 1, ci, co]  (zero outside taps),
    so  x_rows(N*H, W*Cin) @ band[dy]  performs the full width dimension of a SAME conv.
    """
    K = w_kkio.shape[0]
    cin, cout = w_kkio.shape[2], w_kkio.shape[3]
    wi = jnp.arange(width)[:, None]          # input column
    wo = jnp.arange(width)[None, :]          # output column
    dx = wi - wo + K // 2
    valid = (dx >= 0) & (dx < K)
    taps = w_kkio[:, jnp.clip(dx, 0, K - 1), :, :]                 # (K, W, W, Cin, Cout)
    taps = jnp.where(valid[None, :, :, None, None], taps, 0.0)
    return taps.transpose(0, 1, 3, 2, 4).reshape(K, width * cin, width * cout)


def _full_spec(shape):
    n = len(shape)
    return pl.BlockSpec(shape, lambda i, _n=n: (0,) * _n)


@jax.jit
def resblock2d_forward(x_nhwc, params):
    """ResBlock2d forward (training-mode BN).  x_nhwc: (N, H, W, Cin) float32."""
    N, H, W, Cin = x_nhwc.shape
    Cout = params["w1"].shape[-1]
    f32 = jnp.float32

    # fold conv weights into MXU-friendly band / block-diagonal matrices
    band1 = _band_from_3x3(params["w1"].reshape(3, 3, Cin, Cout), W)   # (3, W*Cin,  W*Cout)
    band2 = _band_from_3x3(params["w2"].reshape(3, 3, Cout, Cout), W)  # (3, W*Cout, W*Cout)
    skipw = jnp.kron(jnp.eye(W, dtype=f32), params["w3"])              # (W*Cin,  W*Cout)

    # gamma/beta pre-tiled to the lane-dense (1, W*Cout) layout (wrapper-side, once)
    g1_l = jnp.tile(params["g1"], (1, W))
    b1_l = jnp.tile(params["b1"], (1, W))
    g2_l = jnp.tile(params["g2"], (1, W))
    b2_l = jnp.tile(params["b2"], (1, W))

    x_rows = x_nhwc.reshape(N, H, W * Cin)   # channels folded into lanes (free reshape)

    kernel = functools.partial(resblock_kernel, width=W)

    out_flat = pl.pallas_call(
        kernel,
        out_shape=jax.ShapeDtypeStruct((N * H, W * Cout), f32),
        grid=(1,),
        in_specs=[_full_spec(a.shape) for a in
                  (x_rows, band1, band2, skipw, g1_l, b1_l, g2_l, b2_l)],
        out_specs=_full_spec((N * H, W * Cout)),
        scratch_shapes=[pltpu.VMEM((N, H + 2, W * Cin), f32),    # x with height halo
                        pltpu.VMEM((N, H + 2, W * Cout), f32)],  # h with height halo
        compiler_params=pltpu.CompilerParams(dimension_semantics=("arbitrary",)),
    )(x_rows, band1, band2, skipw, g1_l, b1_l, g2_l, b2_l)

    return out_flat.reshape(N, H, W, Cout)


# ---------------------------------------------------------------------------
# Pure-JAX reference (sanity check)
# ---------------------------------------------------------------------------
def _leaky_ref(h):
    return jnp.where(h > 0, h, NEG_SLOPE * h)


def _bn_ref(h, gamma, beta):
    mean = jnp.mean(h, axis=(0, 1, 2), keepdims=True)
    var = jnp.mean((h - mean) ** 2, axis=(0, 1, 2), keepdims=True)
    return (h - mean) * jax.lax.rsqrt(var + EPS) * gamma.reshape(1, 1, 1, -1) \
        + beta.reshape(1, 1, 1, -1)


def reference_forward(x_nhwc, params):
    dn = ("NHWC", "HWIO", "NHWC")
    conv = functools.partial(
        jax.lax.conv_general_dilated,
        window_strides=(1, 1), dimension_numbers=dn,
        precision=jax.lax.Precision.HIGHEST,
    )
    Cin = x_nhwc.shape[-1]
    Cout = params["w1"].shape[-1]
    w1 = params["w1"].reshape(3, 3, Cin, Cout)
    w2 = params["w2"].reshape(3, 3, Cout, Cout)
    w3 = params["w3"].reshape(1, 1, Cin, Cout)

    h = conv(x_nhwc, w1, padding="SAME")
    h = _leaky_ref(_bn_ref(h, params["g1"][0], params["b1"][0]))
    h = conv(h, w2, padding="SAME")
    h = _bn_ref(h, params["g2"][0], params["b2"][0])
    skip = conv(x_nhwc, w3, padding="VALID")
    return _leaky_ref(skip + h)


# ---------------------------------------------------------------------------
if __name__ == "__main__":
    N, H, W = 2, 16, 16
    Cin, Cout = 4, 8

    key = jax.random.PRNGKey(0)
    kx, k1, k2, k3, kg1, kb1, kg2, kb2 = jax.random.split(key, 8)

    # deterministic synthetic parameters (shapes follow the PyTorch __init__)
    params = {
        "w1": 0.2 * jax.random.normal(k1, (3 * 3, Cin, Cout), jnp.float32),   # conv1 3x3 (HWIO flat)
        "w2": 0.2 * jax.random.normal(k2, (3 * 3, Cout, Cout), jnp.float32),  # conv2 3x3
        "w3": 0.2 * jax.random.normal(k3, (Cin, Cout), jnp.float32),          # conv3 1x1
        "g1": 1.0 + 0.1 * jax.random.normal(kg1, (1, Cout), jnp.float32),     # bn1 gamma
        "b1": 0.1 * jax.random.normal(kb1, (1, Cout), jnp.float32),           # bn1 beta
        "g2": 1.0 + 0.1 * jax.random.normal(kg2, (1, Cout), jnp.float32),     # bn2 gamma
        "b2": 0.1 * jax.random.normal(kb2, (1, Cout), jnp.float32),           # bn2 beta
    }

    # input in NHWC (== the PyTorch NCHW [2, 4, 16, 16] input, channels-last)
    x = jax.random.normal(kx, (N, H, W, Cin), jnp.float32)

    out = resblock2d_forward(x, params)
    out = jax.block_until_ready(out)

    ref = reference_forward(x, params)
    np.testing.assert_allclose(np.asarray(out), np.asarray(ref), rtol=2e-2, atol=2e-2)

    print("KERNEL_OK")
</pallas_src>

<mosaic_0001>
module attributes {stable_mosaic.version = 11 : i64} {
  func.func @resblock_kernel(%arg0: i32, %arg1: memref<2x16x64xf32, #tpu.memory_space<vmem>>, %arg2: memref<3x64x128xf32, #tpu.memory_space<vmem>>, %arg3: memref<3x128x128xf32, #tpu.memory_space<vmem>>, %arg4: memref<64x128xf32, #tpu.memory_space<vmem>>, %arg5: memref<1x128xf32, #tpu.memory_space<vmem>>, %arg6: memref<1x128xf32, #tpu.memory_space<vmem>>, %arg7: memref<1x128xf32, #tpu.memory_space<vmem>>, %arg8: memref<1x128xf32, #tpu.memory_space<vmem>>, %arg9: memref<32x128xf32, #tpu.memory_space<vmem>>, %arg10: memref<2x18x64xf32, #tpu.memory_space<vmem>>, %arg11: memref<2x18x128xf32, #tpu.memory_space<vmem>>) attributes {dimension_semantics = [#tpu.dimension_semantics<arbitrary>], iteration_bounds = array<i64: 1>, scalar_prefetch = 0 : i64, scratch_operands = 2 : i64, tpu.core_type = #tpu.core_type<tc>, window_params = [{pipeline_mode = #tpu.pipeline_mode<synchronous>, transform_indices = @transform_0, window_bounds = array<i64: 2, 16, 64>}, {pipeline_mode = #tpu.pipeline_mode<synchronous>, transform_indices = @transform_1, window_bounds = array<i64: 3, 64, 128>}, {pipeline_mode = #tpu.pipeline_mode<synchronous>, transform_indices = @transform_2, window_bounds = array<i64: 3, 128, 128>}, {pipeline_mode = #tpu.pipeline_mode<synchronous>, transform_indices = @transform_3, window_bounds = array<i64: 64, 128>}, {pipeline_mode = #tpu.pipeline_mode<synchronous>, transform_indices = @transform_4, window_bounds = array<i64: 1, 128>}, {pipeline_mode = #tpu.pipeline_mode<synchronous>, transform_indices = @transform_5, window_bounds = array<i64: 1, 128>}, {pipeline_mode = #tpu.pipeline_mode<synchronous>, transform_indices = @transform_6, window_bounds = array<i64: 1, 128>}, {pipeline_mode = #tpu.pipeline_mode<synchronous>, transform_indices = @transform_7, window_bounds = array<i64: 1, 128>}, {pipeline_mode = #tpu.pipeline_mode<synchronous>, transform_indices = @transform_8, window_bounds = array<i64: 32, 128>}]} {
    %cst = arith.constant 0.000000e+00 : f32
    %0 = vector.broadcast %cst : f32 to vector<2x1x64xf32>
    %c0 = arith.constant 0 : index
    %c0_0 = arith.constant 0 : index
    %c0_1 = arith.constant 0 : index
    %1 = vector.load %arg10[%c0, %c0_0, %c0_1] : memref<2x18x64xf32, #tpu.memory_space<vmem>>, vector<2x1x64xf32>
    tpu.vector_store %arg10[%c0, %c0_0, %c0_1], %0 {strides = array<i32>} : memref<2x18x64xf32, #tpu.memory_space<vmem>>, vector<2x1x64xf32>,
    %cst_2 = arith.constant 0.000000e+00 : f32
    %2 = vector.broadcast %cst_2 : f32 to vector<2x1x64xf32>
    %c0_3 = arith.constant 0 : index
    %c17 = arith.constant 17 : index
    %c0_4 = arith.constant 0 : index
    %3 = vector.load %arg10[%c0_3, %c17, %c0_4] : memref<2x18x64xf32, #tpu.memory_space<vmem>>, vector<2x1x64xf32>
    tpu.vector_store %arg10[%c0_3, %c17, %c0_4], %2 {strides = array<i32>} : memref<2x18x64xf32, #tpu.memory_space<vmem>>, vector<2x1x64xf32>,
    %c0_5 = arith.constant 0 : index
    %c0_6 = arith.constant 0 : index
    %c0_7 = arith.constant 0 : index
    %4 = vector.load %arg1[%c0_5, %c0_6, %c0_7] : memref<2x16x64xf32, #tpu.memory_space<vmem>>, vector<2x16x64xf32>
    %c0_8 = arith.constant 0 : index
    %c1 = arith.constant 1 : index
    %c0_9 = arith.constant 0 : index
    %5 = vector.load %arg10[%c0_8, %c1, %c0_9] : memref<2x18x64xf32, #tpu.memory_space<vmem>>, vector<2x16x64xf32>
    tpu.vector_store %arg10[%c0_8, %c1, %c0_9], %4 {strides = array<i32>} : memref<2x18x64xf32, #tpu.memory_space<vmem>>, vector<2x16x64xf32>,
    %c0_10 = arith.constant 0 : index
    %c0_11 = arith.constant 0 : index
    %c0_12 = arith.constant 0 : index
    %6 = vector.load %arg1[%c0_10, %c0_11, %c0_12] : memref<2x16x64xf32, #tpu.memory_space<vmem>>, vector<2x16x64xf32>
    %7 = vector.shape_cast %6 : vector<2x16x64xf32> to vector<32x64xf32>
    %c0_13 = arith.constant 0 : index
    %c0_14 = arith.constant 0 : index
    %8 = vector.load %arg4[%c0_13, %c0_14] : memref<64x128xf32, #tpu.memory_space<vmem>>, vector<64x128xf32>
    %cst_15 = arith.constant dense<0.000000e+00> : vector<32x128xf32>
    %9 = tpu.matmul %7, %8, %cst_15 {dimension_numbers = #tpu.dot_dimension_numbers<[1], [0], [0], [1], [0, 0, 1, 1], [], []>} : vector<32x64xf32>, vector<64x128xf32>, vector<32x128xf32> -> vector<32x128xf32>
    %c0_16 = arith.constant 0 : index
    %c0_17 = arith.constant 0 : index
    %c0_18 = arith.constant 0 : index
    %10 = vector.load %arg10[%c0_16, %c0_17, %c0_18] : memref<2x18x64xf32, #tpu.memory_space<vmem>>, vector<2x16x64xf32>
    %11 = vector.shape_cast %10 : vector<2x16x64xf32> to vector<32x64xf32>
    %c0_19 = arith.constant 0 : index
    %c0_20 = arith.constant 0 : index
    %c0_21 = arith.constant 0 : index
    %12 = vector.load %arg2[%c0_19, %c0_20, %c0_21] : memref<3x64x128xf32, #tpu.memory_space<vmem>>, vector<1x64x128xf32>
    %13 = vector.shape_cast %12 : vector<1x64x128xf32> to vector<64x128xf32>
    %cst_22 = arith.constant dense<0.000000e+00> : vector<32x128xf32>
    %14 = tpu.matmul %11, %13, %cst_22 {dimension_numbers = #tpu.dot_dimension_numbers<[1], [0], [0], [1], [0, 0, 1, 1], [], []>} : vector<32x64xf32>, vector<64x128xf32>, vector<32x128xf32> -> vector<32x128xf32>
    %c0_23 = arith.constant 0 : index
    %c1_24 = arith.constant 1 : index
    %c0_25 = arith.constant 0 : index
    %15 = vector.load %arg10[%c0_23, %c1_24, %c0_25] : memref<2x18x64xf32, #tpu.memory_space<vmem>>, vector<2x16x64xf32>
    %16 = vector.shape_cast %15 : vector<2x16x64xf32> to vector<32x64xf32>
    %c1_26 = arith.constant 1 : index
    %c0_27 = arith.constant 0 : index
    %c0_28 = arith.constant 0 : index
    %17 = vector.load %arg2[%c1_26, %c0_27, %c0_28] : memref<3x64x128xf32, #tpu.memory_space<vmem>>, vector<1x64x128xf32>
    %18 = vector.shape_cast %17 : vector<1x64x128xf32> to vector<64x128xf32>
    %cst_29 = arith.constant dense<0.000000e+00> : vector<32x128xf32>
    %19 = tpu.matmul %16, %18, %cst_29 {dimension_numbers = #tpu.dot_dimension_numbers<[1], [0], [0], [1], [0, 0, 1, 1], [], []>} : vector<32x64xf32>, vector<64x128xf32>, vector<32x128xf32> -> vector<32x128xf32>
    %20 = arith.addf %14, %19 : vector<32x128xf32>
    %c0_30 = arith.constant 0 : index
    %c2 = arith.constant 2 : index
    %c0_31 = arith.constant 0 : index
    %21 = vector.load %arg10[%c0_30, %c2, %c0_31] : memref<2x18x64xf32, #tpu.memory_space<vmem>>, vector<2x16x64xf32>
    %22 = vector.shape_cast %21 : vector<2x16x64xf32> to vector<32x64xf32>
    %c2_32 = arith.constant 2 : index
    %c0_33 = arith.constant 0 : index
    %c0_34 = arith.constant 0 : index
    %23 = vector.load %arg2[%c2_32, %c0_33, %c0_34] : memref<3x64x128xf32, #tpu.memory_space<vmem>>, vector<1x64x128xf32>
    %24 = vector.shape_cast %23 : vector<1x64x128xf32> to vector<64x128xf32>
    %cst_35 = arith.constant dense<0.000000e+00> : vector<32x128xf32>
    %25 = tpu.matmul %22, %24, %cst_35 {dimension_numbers = #tpu.dot_dimension_numbers<[1], [0], [0], [1], [0, 0, 1, 1], [], []>} : vector<32x64xf32>, vector<64x128xf32>, vector<32x128xf32> -> vector<32x128xf32>
    %26 = arith.addf %20, %25 : vector<32x128xf32>
    %c0_36 = arith.constant 0 : index
    %c0_37 = arith.constant 0 : index
    %27 = vector.load %arg5[%c0_36, %c0_37] : memref<1x128xf32, #tpu.memory_space<vmem>>, vector<1x128xf32>
    %c0_38 = arith.constant 0 : index
    %c0_39 = arith.constant 0 : index
    %28 = vector.load %arg6[%c0_38, %c0_39] : memref<1x128xf32, #tpu.memory_space<vmem>>, vector<1x128xf32>
    %cst_40 = arith.constant dense<0.000000e+00> : vector<128xf32>
    %29 = vector.multi_reduction <add>, %26, %cst_40 [0] : vector<32x128xf32> to vector<128xf32>
    %30 = vector.shape_cast %29 : vector<128xf32> to vector<1x128xf32>
    %c8_i32 = arith.constant 8 : i32
    %31 = tpu.dynamic_rotate %30 by %c8_i32 dim 1 : vector<1x128xf32>, i32 -> vector<1x128xf32>
    %32 = arith.addf %30, %31 : vector<1x128xf32>
    %c16_i32 = arith.constant 16 : i32
    %33 = tpu.dynamic_rotate %32 by %c16_i32 dim 1 : vector<1x128xf32>, i32 -> vector<1x128xf32>
    %34 = arith.addf %32, %33 : vector<1x128xf32>
    %c32_i32 = arith.constant 32 : i32
    %35 = tpu.dynamic_rotate %34 by %c32_i32 dim 1 : vector<1x128xf32>, i32 -> vector<1x128xf32>
    %36 = arith.addf %34, %35 : vector<1x128xf32>
    %c64_i32 = arith.constant 64 : i32
    %37 = tpu.dynamic_rotate %36 by %c64_i32 dim 1 : vector<1x128xf32>, i32 -> vector<1x128xf32>
    %38 = arith.addf %36, %37 : vector<1x128xf32>
    %cst_41 = arith.constant 0.001953125 : f32
    %39 = vector.broadcast %cst_41 : f32 to vector<1x128xf32>
    %40 = arith.mulf %38, %39 : vector<1x128xf32>
    %41 = vector.broadcast %40 : vector<1x128xf32> to vector<32x128xf32>
    %42 = arith.subf %26, %41 : vector<32x128xf32>
    %43 = arith.mulf %42, %42 : vector<32x128xf32>
    %cst_42 = arith.constant dense<0.000000e+00> : vector<128xf32>
    %44 = vector.multi_reduction <add>, %43, %cst_42 [0] : vector<32x128xf32> to vector<128xf32>
    %45 = vector.shape_cast %44 : vector<128xf32> to vector<1x128xf32>
    %c8_i32_43 = arith.constant 8 : i32
    %46 = tpu.dynamic_rotate %45 by %c8_i32_43 dim 1 : vector<1x128xf32>, i32 -> vector<1x128xf32>
    %47 = arith.addf %45, %46 : vector<1x128xf32>
    %c16_i32_44 = arith.constant 16 : i32
    %48 = tpu.dynamic_rotate %47 by %c16_i32_44 dim 1 : vector<1x128xf32>, i32 -> vector<1x128xf32>
    %49 = arith.addf %47, %48 : vector<1x128xf32>
    %c32_i32_45 = arith.constant 32 : i32
    %50 = tpu.dynamic_rotate %49 by %c32_i32_45 dim 1 : vector<1x128xf32>, i32 -> vector<1x128xf32>
    %51 = arith.addf %49, %50 : vector<1x128xf32>
    %c64_i32_46 = arith.constant 64 : i32
    %52 = tpu.dynamic_rotate %51 by %c64_i32_46 dim 1 : vector<1x128xf32>, i32 -> vector<1x128xf32>
    %53 = arith.addf %51, %52 : vector<1x128xf32>
    %cst_47 = arith.constant 0.001953125 : f32
    %54 = vector.broadcast %cst_47 : f32 to vector<1x128xf32>
    %55 = arith.mulf %53, %54 : vector<1x128xf32>
    %cst_48 = arith.constant 9.99999974E-5 : f32
    %56 = vector.broadcast %cst_48 : f32 to vector<1x128xf32>
    %57 = arith.addf %55, %56 : vector<1x128xf32>
    %58 = math.rsqrt %57 : vector<1x128xf32>
    %59 = arith.mulf %27, %58 : vector<1x128xf32>
    %60 = arith.mulf %40, %59 : vector<1x128xf32>
    %61 = arith.subf %28, %60 : vector<1x128xf32>
    %62 = vector.broadcast %59 : vector<1x128xf32> to vector<32x128xf32>
    %63 = arith.mulf %26, %62 : vector<32x128xf32>
    %64 = vector.broadcast %61 : vector<1x128xf32> to vector<32x128xf32>
    %65 = arith.addf %63, %64 : vector<32x128xf32>
    %cst_49 = arith.constant 0.000000e+00 : f32
    %66 = vector.broadcast %cst_49 : f32 to vector<32x128xf32>
    %67 = arith.cmpf ogt, %65, %66 : vector<32x128xf32>
    %cst_50 = arith.constant 2.000000e-01 : f32
    %68 = vector.broadcast %cst_50 : f32 to vector<32x128xf32>
    %69 = arith.mulf %68, %65 : vector<32x128xf32>
    %70 = arith.select %67, %65, %69 : vector<32x128xi1>, vector<32x128xf32>
    %cst_51 = arith.constant 0.000000e+00 : f32
    %71 = vector.broadcast %cst_51 : f32 to vector<2x1x128xf32>
    %c0_52 = arith.constant 0 : index
    %c0_53 = arith.constant 0 : index
    %c0_54 = arith.constant 0 : index
    %72 = vector.load %arg11[%c0_52, %c0_53, %c0_54] : memref<2x18x128xf32, #tpu.memory_space<vmem>>, vector<2x1x128xf32>
    tpu.vector_store %arg11[%c0_52, %c0_53, %c0_54], %71 {strides = array<i32>} : memref<2x18x128xf32, #tpu.memory_space<vmem>>, vector<2x1x128xf32>,
    %cst_55 = arith.constant 0.000000e+00 : f32
    %73 = vector.broadcast %cst_55 : f32 to vector<2x1x128xf32>
    %c0_56 = arith.constant 0 : index
    %c17_57 = arith.constant 17 : index
    %c0_58 = arith.constant 0 : index
    %74 = vector.load %arg11[%c0_56, %c17_57, %c0_58] : memref<2x18x128xf32, #tpu.memory_space<vmem>>, vector<2x1x128xf32>
    tpu.vector_store %arg11[%c0_56, %c17_57, %c0_58], %73 {strides = array<i32>} : memref<2x18x128xf32, #tpu.memory_space<vmem>>, vector<2x1x128xf32>,
    %75 = vector.shape_cast %70 : vector<32x128xf32> to vector<2x16x128xf32>
    %c0_59 = arith.constant 0 : index
    %c1_60 = arith.constant 1 : index
    %c0_61 = arith.constant 0 : index
    %76 = vector.load %arg11[%c0_59, %c1_60, %c0_61] : memref<2x18x128xf32, #tpu.memory_space<vmem>>, vector<2x16x128xf32>
    tpu.vector_store %arg11[%c0_59, %c1_60, %c0_61], %75 {strides = array<i32>} : memref<2x18x128xf32, #tpu.memory_space<vmem>>, vector<2x16x128xf32>,
    %c0_62 = arith.constant 0 : index
    %c0_63 = arith.constant 0 : index
    %c0_64 = arith.constant 0 : index
    %77 = vector.load %arg11[%c0_62, %c0_63, %c0_64] : memref<2x18x128xf32, #tpu.memory_space<vmem>>, vector<2x16x128xf32>
    %78 = vector.shape_cast %77 : vector<2x16x128xf32> to vector<32x128xf32>
    %c0_65 = arith.constant 0 : index
    %c0_66 = arith.constant 0 : index
    %c0_67 = arith.constant 0 : index
    %79 = vector.load %arg3[%c0_65, %c0_66, %c0_67] : memref<3x128x128xf32, #tpu.memory_space<vmem>>, vector<1x128x128xf32>
    %80 = vector.shape_cast %79 : vector<1x128x128xf32> to vector<128x128xf32>
    %cst_68 = arith.constant dense<0.000000e+00> : vector<32x128xf32>
    %81 = tpu.matmul %78, %80, %cst_68 {dimension_numbers = #tpu.dot_dimension_numbers<[1], [0], [0], [1], [0, 0, 1, 1], [], []>} : vector<32x128xf32>, vector<128x128xf32>, vector<32x128xf32> -> vector<32x128xf32>
    %c0_69 = arith.constant 0 : index
    %c1_70 = arith.constant 1 : index
    %c0_71 = arith.constant 0 : index
    %82 = vector.load %arg11[%c0_69, %c1_70, %c0_71] : memref<2x18x128xf32, #tpu.memory_space<vmem>>, vector<2x16x128xf32>
    %83 = vector.shape_cast %82 : vector<2x16x128xf32> to vector<32x128xf32>
    %c1_72 = arith.constant 1 : index
    %c0_73 = arith.constant 0 : index
    %c0_74 = arith.constant 0 : index
    %84 = vector.load %arg3[%c1_72, %c0_73, %c0_74] : memref<3x128x128xf32, #tpu.memory_space<vmem>>, vector<1x128x128xf32>
    %85 = vector.shape_cast %84 : vector<1x128x128xf32> to vector<128x128xf32>
    %cst_75 = arith.constant dense<0.000000e+00> : vector<32x128xf32>
    %86 = tpu.matmul %83, %85, %cst_75 {dimension_numbers = #tpu.dot_dimension_numbers<[1], [0], [0], [1], [0, 0, 1, 1], [], []>} : vector<32x128xf32>, vector<128x128xf32>, vector<32x128xf32> -> vector<32x128xf32>
    %87 = arith.addf %81, %86 : vector<32x128xf32>
    %c0_76 = arith.constant 0 : index
    %c2_77 = arith.constant 2 : index
    %c0_78 = arith.constant 0 : index
    %88 = vector.load %arg11[%c0_76, %c2_77, %c0_78] : memref<2x18x128xf32, #tpu.memory_space<vmem>>, vector<2x16x128xf32>
    %89 = vector.shape_cast %88 : vector<2x16x128xf32> to vector<32x128xf32>
    %c2_79 = arith.constant 2 : index
    %c0_80 = arith.constant 0 : index
    %c0_81 = arith.constant 0 : index
    %90 = vector.load %arg3[%c2_79, %c0_80, %c0_81] : memref<3x128x128xf32, #tpu.memory_space<vmem>>, vector<1x128x128xf32>
    %91 = vector.shape_cast %90 : vector<1x128x128xf32> to vector<128x128xf32>
    %cst_82 = arith.constant dense<0.000000e+00> : vector<32x128xf32>
    %92 = tpu.matmul %89, %91, %cst_82 {dimension_numbers = #tpu.dot_dimension_numbers<[1], [0], [0], [1], [0, 0, 1, 1], [], []>} : vector<32x128xf32>, vector<128x128xf32>, vector<32x128xf32> -> vector<32x128xf32>
    %93 = arith.addf %87, %92 : vector<32x128xf32>
    %c0_83 = arith.constant 0 : index
    %c0_84 = arith.constant 0 : index
    %94 = vector.load %arg7[%c0_83, %c0_84] : memref<1x128xf32, #tpu.memory_space<vmem>>, vector<1x128xf32>
    %c0_85 = arith.constant 0 : index
    %c0_86 = arith.constant 0 : index
    %95 = vector.load %arg8[%c0_85, %c0_86] : memref<1x128xf32, #tpu.memory_space<vmem>>, vector<1x128xf32>
    %cst_87 = arith.constant dense<0.000000e+00> : vector<128xf32>
    %96 = vector.multi_reduction <add>, %93, %cst_87 [0] : vector<32x128xf32> to vector<128xf32>
    %97 = vector.shape_cast %96 : vector<128xf32> to vector<1x128xf32>
    %c8_i32_88 = arith.constant 8 : i32
    %98 = tpu.dynamic_rotate %97 by %c8_i32_88 dim 1 : vector<1x128xf32>, i32 -> vector<1x128xf32>
    %99 = arith.addf %97, %98 : vector<1x128xf32>
    %c16_i32_89 = arith.constant 16 : i32
    %100 = tpu.dynamic_rotate %99 by %c16_i32_89 dim 1 : vector<1x128xf32>, i32 -> vector<1x128xf32>
    %101 = arith.addf %99, %100 : vector<1x128xf32>
    %c32_i32_90 = arith.constant 32 : i32
    %102 = tpu.dynamic_rotate %101 by %c32_i32_90 dim 1 : vector<1x128xf32>, i32 -> vector<1x128xf32>
    %103 = arith.addf %101, %102 : vector<1x128xf32>
    %c64_i32_91 = arith.constant 64 : i32
    %104 = tpu.dynamic_rotate %103 by %c64_i32_91 dim 1 : vector<1x128xf32>, i32 -> vector<1x128xf32>
    %105 = arith.addf %103, %104 : vector<1x128xf32>
    %cst_92 = arith.constant 0.001953125 : f32
    %106 = vector.broadcast %cst_92 : f32 to vector<1x128xf32>
    %107 = arith.mulf %105, %106 : vector<1x128xf32>
    %108 = vector.broadcast %107 : vector<1x128xf32> to vector<32x128xf32>
    %109 = arith.subf %93, %108 : vector<32x128xf32>
    %110 = arith.mulf %109, %109 : vector<32x128xf32>
    %cst_93 = arith.constant dense<0.000000e+00> : vector<128xf32>
    %111 = vector.multi_reduction <add>, %110, %cst_93 [0] : vector<32x128xf32> to vector<128xf32>
    %112 = vector.shape_cast %111 : vector<128xf32> to vector<1x128xf32>
    %c8_i32_94 = arith.constant 8 : i32
    %113 = tpu.dynamic_rotate %112 by %c8_i32_94 dim 1 : vector<1x128xf32>, i32 -> vector<1x128xf32>
    %114 = arith.addf %112, %113 : vector<1x128xf32>
    %c16_i32_95 = arith.constant 16 : i32
    %115 = tpu.dynamic_rotate %114 by %c16_i32_95 dim 1 : vector<1x128xf32>, i32 -> vector<1x128xf32>
    %116 = arith.addf %114, %115 : vector<1x128xf32>
    %c32_i32_96 = arith.constant 32 : i32
    %117 = tpu.dynamic_rotate %116 by %c32_i32_96 dim 1 : vector<1x128xf32>, i32 -> vector<1x128xf32>
    %118 = arith.addf %116, %117 : vector<1x128xf32>
    %c64_i32_97 = arith.constant 64 : i32
    %119 = tpu.dynamic_rotate %118 by %c64_i32_97 dim 1 : vector<1x128xf32>, i32 -> vector<1x128xf32>
    %120 = arith.addf %118, %119 : vector<1x128xf32>
    %cst_98 = arith.constant 0.001953125 : f32
    %121 = vector.broadcast %cst_98 : f32 to vector<1x128xf32>
    %122 = arith.mulf %120, %121 : vector<1x128xf32>
    %cst_99 = arith.constant 9.99999974E-5 : f32
    %123 = vector.broadcast %cst_99 : f32 to vector<1x128xf32>
    %124 = arith.addf %122, %123 : vector<1x128xf32>
    %125 = math.rsqrt %124 : vector<1x128xf32>
    %126 = arith.mulf %94, %125 : vector<1x128xf32>
    %127 = arith.mulf %107, %126 : vector<1x128xf32>
    %128 = arith.subf %95, %127 : vector<1x128xf32>
    %129 = vector.broadcast %126 : vector<1x128xf32> to vector<32x128xf32>
    %130 = arith.mulf %93, %129 : vector<32x128xf32>
    %131 = vector.broadcast %128 : vector<1x128xf32> to vector<32x128xf32>
    %132 = arith.addf %130, %131 : vector<32x128xf32>
    %133 = arith.addf %9, %132 : vector<32x128xf32>
    %cst_100 = arith.constant 0.000000e+00 : f32
    %134 = vector.broadcast %cst_100 : f32 to vector<32x128xf32>
    %135 = arith.cmpf ogt, %133, %134 : vector<32x128xf32>
    %cst_101 = arith.constant 2.000000e-01 : f32
    %136 = vector.broadcast %cst_101 : f32 to vector<32x128xf32>
    %137 = arith.mulf %136, %133 : vector<32x128xf32>
    %138 = arith.select %135, %133, %137 : vector<32x128xi1>, vector<32x128xf32>
    %c0_102 = arith.constant 0 : index
    %c0_103 = arith.constant 0 : index
    %139 = vector.load %arg9[%c0_102, %c0_103] : memref<32x128xf32, #tpu.memory_space<vmem>>, vector<32x128xf32>
    tpu.vector_store %arg9[%c0_102, %c0_103], %138 {strides = array<i32>} : memref<32x128xf32, #tpu.memory_space<vmem>>, vector<32x128xf32>,
    return
  }
  func.func @transform_0(%arg0: i32) -> (i32, i32, i32) {
    %c0_i32 = arith.constant 0 : i32
    %c0_i32_0 = arith.constant 0 : i32
    %c0_i32_1 = arith.constant 0 : i32
    %c0_i32_2 = arith.constant 0 : i32
    return %c0_i32, %c0_i32_0, %c0_i32_1 : i32, i32, i32
  }
  func.func @transform_1(%arg0: i32) -> (i32, i32, i32) {
    %c0_i32 = arith.constant 0 : i32
    %c0_i32_0 = arith.constant 0 : i32
    %c0_i32_1 = arith.constant 0 : i32
    %c0_i32_2 = arith.constant 0 : i32
    return %c0_i32, %c0_i32_0, %c0_i32_1 : i32, i32, i32
  }
  func.func @transform_2(%arg0: i32) -> (i32, i32, i32) {
    %c0_i32 = arith.constant 0 : i32
    %c0_i32_0 = arith.constant 0 : i32
    %c0_i32_1 = arith.constant 0 : i32
    %c0_i32_2 = arith.constant 0 : i32
    return %c0_i32, %c0_i32_0, %c0_i32_1 : i32, i32, i32
  }
  func.func @transform_3(%arg0: i32) -> (i32, i32) {
    %c0_i32 = arith.constant 0 : i32
    %c0_i32_0 = arith.constant 0 : i32
    %c0_i32_1 = arith.constant 0 : i32
    return %c0_i32, %c0_i32_0 : i32, i32
  }
  func.func @transform_4(%arg0: i32) -> (i32, i32) {
    %c0_i32 = arith.constant 0 : i32
    %c0_i32_0 = arith.constant 0 : i32
    %c0_i32_1 = arith.constant 0 : i32
    return %c0_i32, %c0_i32_0 : i32, i32
  }
  func.func @transform_5(%arg0: i32) -> (i32, i32) {
    %c0_i32 = arith.constant 0 : i32
    %c0_i32_0 = arith.constant 0 : i32
    %c0_i32_1 = arith.constant 0 : i32
    return %c0_i32, %c0_i32_0 : i32, i32
  }
  func.func @transform_6(%arg0: i32) -> (i32, i32) {
    %c0_i32 = arith.constant 0 : i32
    %c0_i32_0 = arith.constant 0 : i32
    %c0_i32_1 = arith.constant 0 : i32
    return %c0_i32, %c0_i32_0 : i32, i32
  }
  func.func @transform_7(%arg0: i32) -> (i32, i32) {
    %c0_i32 = arith.constant 0 : i32
    %c0_i32_0 = arith.constant 0 : i32
    %c0_i32_1 = arith.constant 0 : i32
    return %c0_i32, %c0_i32_0 : i32, i32
  }
  func.func @transform_8(%arg0: i32) -> (i32, i32) {
    %c0_i32 = arith.constant 0 : i32
    %c0_i32_0 = arith.constant 0 : i32
    %c0_i32_1 = arith.constant 0 : i32
    return %c0_i32, %c0_i32_0 : i32, i32
  }
}

</mosaic_0001>

<llo_original>
// kernel: resblock2d_forward.1
$region0: #{resblock2d_forward.1}
  #allocation0 [shape = 'u32[]', space=smem, size = 0x4, offset = 0x4, fixed_abs, tag = 'smem constant byte address 0x4 - core index']
  #allocation1 [shape = 'u32[144,128]{1,0:T(1,128)}', space=vmem, size = 0x12000, scoped, tag = 'internal scratch']
  #allocation2 [shape = 'f32[2,18,64]{2,1,0:T(8,128)}', space=vmem, size = 0x6000, scoped, tag = 'scratch operand']
  #allocation3 [shape = 'f32[2,18,128]{2,1,0:T(8,128)}', space=vmem, size = 0x6000, scoped, tag = 'scratch operand']
  %s0 = inlined_call_operand.vmem [shape: f32[2,16,64], index: 0, kind: input, shape index: {}]
  %s1 = inlined_call_operand.vmem [shape: f32[3,64,128], index: 1, kind: input, shape index: {}]
  %s2 = inlined_call_operand.vmem [shape: f32[3,128,128], index: 2, kind: input, shape index: {}]
  %s3 = inlined_call_operand.vmem [shape: f32[64,128], index: 3, kind: input, shape index: {}]
  %s4 = inlined_call_operand.vmem [shape: f32[1,128], index: 4, kind: input, shape index: {}]
  %s5 = inlined_call_operand.vmem [shape: f32[1,128], index: 5, kind: input, shape index: {}]
  %s6 = inlined_call_operand.vmem [shape: f32[1,128], index: 6, kind: input, shape index: {}]
  %s7 = inlined_call_operand.vmem [shape: f32[1,128], index: 7, kind: input, shape index: {}]
  %s8 = inlined_call_operand.vmem [shape: f32[32,128], index: 8, kind: output, shape index: {}]
  %s9 = sld [smem:[#allocation0]]
  $region42: #{resblock2d_forward.1} parent=0
    _
  %s11 = ssub.s32 1, %s9
  %s12 = scalar_select 0, %s11, %s9
  // Predicated region
  $region2: #{resblock2d_forward.1} parent=0 // pred_check
    _
  $region3: #{resblock2d_forward.1} parent=0 // pred_check_branch
    %14 = sbr.rel (0) target = $region5
  $region4: #{resblock2d_forward.1} parent=0 // pred_region
    _
  $region5: #{resblock2d_forward.1} parent=0 // pred_fallthru
    _
  // Predicated region
  $region6: #{resblock2d_forward.1} parent=0 // pred_check
    _
  $region7: #{resblock2d_forward.1} parent=0 // pred_check_branch
    %16 = sbr.rel (0) target = $region9
  $region8: #{resblock2d_forward.1} parent=0 // pred_region
    _
  $region9: #{resblock2d_forward.1} parent=0 // pred_fallthru
    _
  // Predicated region
  $region10: #{resblock2d_forward.1} parent=0 // pred_check
    _
  $region11: #{resblock2d_forward.1} parent=0 // pred_check_branch
    %18 = sbr.rel (0) target = $region13
  $region12: #{resblock2d_forward.1} parent=0 // pred_region
    _
  $region13: #{resblock2d_forward.1} parent=0 // pred_fallthru
    _
  // Predicated region
  $region14: #{resblock2d_forward.1} parent=0 // pred_check
    _
  $region15: #{resblock2d_forward.1} parent=0 // pred_check_branch
    %20 = sbr.rel (0) target = $region17
  $region16: #{resblock2d_forward.1} parent=0 // pred_region
    _
  $region17: #{resblock2d_forward.1} parent=0 // pred_fallthru
    _
  // Predicated region
  $region18: #{resblock2d_forward.1} parent=0 // pred_check
    _
  $region19: #{resblock2d_forward.1} parent=0 // pred_check_branch
    %22 = sbr.rel (0) target = $region21
  $region20: #{resblock2d_forward.1} parent=0 // pred_region
    _
  $region21: #{resblock2d_forward.1} parent=0 // pred_fallthru
    _
  // Predicated region
  $region22: #{resblock2d_forward.1} parent=0 // pred_check
    _
  $region23: #{resblock2d_forward.1} parent=0 // pred_check_branch
    %24 = sbr.rel (0) target = $region25
  $region24: #{resblock2d_forward.1} parent=0 // pred_region
    _
  $region25: #{resblock2d_forward.1} parent=0 // pred_fallthru
    _
  // Predicated region
  $region26: #{resblock2d_forward.1} parent=0 // pred_check
    _
  $region27: #{resblock2d_forward.1} parent=0 // pred_check_branch
    %26 = sbr.rel (0) target = $region29
  $region28: #{resblock2d_forward.1} parent=0 // pred_region
    _
  $region29: #{resblock2d_forward.1} parent=0 // pred_fallthru
    _
  // Predicated region
  $region30: #{resblock2d_forward.1} parent=0 // pred_check
    _
  $region31: #{resblock2d_forward.1} parent=0 // pred_check_branch
    %28 = sbr.rel (0) target = $region33
  $region32: #{resblock2d_forward.1} parent=0 // pred_region
    _
  $region33: #{resblock2d_forward.1} parent=0 // pred_fallthru
    _
  %vm29 = vcmask 516096
  %30 = vst.msk [vmem:[#allocation2] sm:$0x1] %vm29, 0.0
  %31 = vst.msk [vmem:[#allocation2 + $0x18] sm:$0x1] %vm29, 0.0
  %32 = vst.msk [vmem:[#allocation2 + $0x11] sm:$0x1] %vm29, 0.0
  %33 = vst.msk [vmem:[#allocation2 + $0x29] sm:$0x1] %vm29, 0.0
  %v34 = vld [vmem:[%s0] sm:$0xff]
  %v35 = vld [vmem:[%s0 + $0x8] sm:$0xff]
  %v36 = vld [vmem:[%s0 + $0x10] sm:$0xff]
  %v37 = vld [vmem:[%s0 + $0x18] sm:$0xff]
  %vm38 = vcmask 523264
  %39 = vst.msk [vmem:[#allocation2 + $0x1] sm:$0xff] %vm38, %v34
  %40 = vst.msk [vmem:[#allocation2 + $0x9] sm:$0xff] %vm38, %v35
  %41 = vst.msk [vmem:[#allocation2 + $0x19] sm:$0xff] %vm38, %v36
  %42 = vst.msk [vmem:[#allocation2 + $0x21] sm:$0xff] %vm38, %v37
  %v43 = vld [vmem:[%s0] sm:$0xff]
  %v44 = vld [vmem:[%s0 + $0x8] sm:$0xff]
  %v45 = vld [vmem:[%s0 + $0x10] sm:$0xff]
  %v46 = vld [vmem:[%s0 + $0x18] sm:$0xff]
  %v47 = vld [vmem:[%s3] sm:$0xff]
  %v48 = vld [vmem:[%s3 + $0x8] sm:$0xff]
  %v49 = vld [vmem:[%s3 + $0x10] sm:$0xff]
  %v50 = vld [vmem:[%s3 + $0x18] sm:$0xff]
  %v51 = vld [vmem:[%s3 + $0x20] sm:$0xff]
  %v52 = vld [vmem:[%s3 + $0x28] sm:$0xff]
  %v53 = vld [vmem:[%s3 + $0x30] sm:$0xff]
  %v54 = vld [vmem:[%s3 + $0x38] sm:$0xff]
  %v55 = vld [vmem:[#allocation2] sm:$0xff]
  %v56 = vld [vmem:[#allocation2 + $0x8] sm:$0xff]
  %v57 = vld [vmem:[#allocation2 + $0x18] sm:$0xff]
  %v58 = vld [vmem:[#allocation2 + $0x20] sm:$0xff]
  %v59 = vld [vmem:[%s1] sm:$0xff]
  %v60 = vld [vmem:[%s1 + $0x8] sm:$0xff]
  %v61 = vld [vmem:[%s1 + $0x10] sm:$0xff]
  %v62 = vld [vmem:[%s1 + $0x18] sm:$0xff]
  %v63 = vld [vmem:[%s1 + $0x20] sm:$0xff]
  %v64 = vld [vmem:[%s1 + $0x28] sm:$0xff]
  %v65 = vld [vmem:[%s1 + $0x30] sm:$0xff]
  %v66 = vld [vmem:[%s1 + $0x38] sm:$0xff]
  %v67 = vld [vmem:[#allocation2 + $0x1] sm:$0xff]
  %v68 = vld [vmem:[#allocation2 + $0x9] sm:$0xff]
  %v69 = vld [vmem:[#allocation2 + $0x19] sm:$0xff]
  %v70 = vld [vmem:[#allocation2 + $0x21] sm:$0xff]
  %s71 = scalar_lea.vmem %s1, 64
  %v72 = vld [vmem:[%s71] sm:$0xff]
  %v73 = vld [vmem:[%s71 + $0x8] sm:$0xff]
  %v74 = vld [vmem:[%s71 + $0x10] sm:$0xff]
  %v75 = vld [vmem:[%s71 + $0x18] sm:$0xff]
  %v76 = vld [vmem:[%s71 + $0x20] sm:$0xff]
  %v77 = vld [vmem:[%s71 + $0x28] sm:$0xff]
  %v78 = vld [vmem:[%s71 + $0x30] sm:$0xff]
  %v79 = vld [vmem:[%s71 + $0x38] sm:$0xff]
  %v81 = vsel %vm38, %v67, 0
  %v84 = vsel %vm38, %v68, 0
  %v87 = vsel %vm38, %v69, 0
  %v90 = vsel %vm38, %v70, 0
  %92 = vmatprep.subr.mxu0 0.0
  %93 = vmatpush1.msra.mxu0 0.0
  %94 = vmatprep.subr.mxu0 0.0
  %95 = vmatpush1.msra.mxu0 0.0
  %96 = vmatprep.subr.mxu0 0.0
  %97 = vmatpush1.msra.mxu0 0.0
  %98 = vmatprep.subr.mxu0 0.0
  %99 = vmatpush1.msra.mxu0 0.0
  %100 = vmatprep.subr.mxu0 0.0
  %101 = vmatpush1.msra.mxu0 0.0
  %102 = vmatprep.subr.mxu0 0.0
  %103 = vmatpush1.msra.mxu0 0.0
  %104 = vmatprep.subr.mxu0 0.0
  %105 = vmatpush1.msra.mxu0 0.0
  %106 = vmatprep.subr.mxu0 0.0
  %107 = vmatpush1.msra.mxu0 0.0
  %108 = vmatprep.subr.mxu0 0.0
  %109 = vmatpush1.msra.mxu0 %v79
  %110 = vmatprep.subr.mxu0 0.0
  %111 = vmatpush1.msra.mxu0 %v78
  %112 = vmatprep.subr.mxu0 0.0
  %113 = vmatpush1.msra.mxu0 %v77
  %114 = vmatprep.subr.mxu0 0.0
  %115 = vmatpush1.msra.mxu0 %v76
  %116 = vmatprep.subr.mxu0 0.0
  %117 = vmatpush1.msra.mxu0 %v75
  %118 = vmatprep.subr.mxu0 0.0
  %119 = vmatpush1.msra.mxu0 %v74
  %120 = vmatprep.subr.mxu0 0.0
  %121 = vmatpush1.msra.mxu0 %v73
  %122 = vmatprep.subr.mxu0 0.0
  %123 = vmatpush1.msra.mxu0 %v72
  %124 = vmatprep.subr.mxu0 0.0
  %125 = vmatpush2.msra.mxu0 0.0
  %126 = vmatprep.subr.mxu0 0.0
  %127 = vmatpush2.msra.mxu0 0.0
  %128 = vmatprep.subr.mxu0 0.0
  %129 = vmatpush2.msra.mxu0 0.0
  %130 = vmatprep.subr.mxu0 0.0
  %131 = vmatpush2.msra.mxu0 0.0
  %132 = vmatprep.subr.mxu0 0.0
  %133 = vmatpush2.msra.mxu0 0.0
  %134 = vmatprep.subr.mxu0 0.0
  %135 = vmatpush2.msra.mxu0 0.0
  %136 = vmatprep.subr.mxu0 0.0
  %137 = vmatpush2.msra.mxu0 0.0
  %138 = vmatprep.subr.mxu0 0.0
  %139 = vmatpush2.msra.mxu0 0.0
  %140 = vmatprep.subr.mxu0 0.0
  %141 = vmatpush2.msra.mxu0 0.0
  %142 = vmatprep.subr.mxu0 0.0
  %143 = vmatpush2.msra.mxu0 0.0
  %144 = vmatprep.subr.mxu0 0.0
  %145 = vmatpush2.msra.mxu0 0.0
  %146 = vmatprep.subr.mxu0 0.0
  %147 = vmatpush2.msra.mxu0 0.0
  %148 = vmatprep.subr.mxu0 0.0
  %149 = vmatpush2.msra.mxu0 0.0
  %150 = vmatprep.subr.mxu0 0.0
  %151 = vmatpush2.msra.mxu0 0.0
  %152 = vmatprep.subr.mxu0 0.0
  %153 = vmatpush2.msra.mxu0 0.0
  %154 = vmatprep.subr.mxu0 0.0
  %155 = vmatpush2.msra.mxu0 0.0
  %156 = vmatprep.mubr.f32.mxu0 0.0
  %157 = vmatmul.mubr.f32.gmra.mxu0 %v81
  %v158 = vpop.f32.mrf.mxu0
  %v159 = vadd.f32 0.0, %v158
  %v160 = vpop.f32.mrf.mxu0
  %161 = vmatprep.mubr.f32.mxu0 0.0
  %162 = vmatmul.mubr.f32.gmra.mxu0 %v84
  %v163 = vpop.f32.mrf.mxu0
  %v164 = vadd.f32 0.0, %v163
  %v165 = vpop.f32.mrf.mxu0
  %166 = vmatprep.mubr.f32.mxu0 0.0
  %167 = vmatmul.mubr.f32.gmra.mxu0 %v87
  %v168 = vpop.f32.mrf.mxu0
  %v169 = vadd.f32 0.0, %v168
  %v170 = vpop.f32.mrf.mxu0
  %171 = vmatprep.mubr.f32.mxu0 0.0
  %172 = vmatmul.mubr.f32.gmra.mxu0 %v90
  %v173 = vpop.f32.mrf.mxu0
  %v174 = vadd.f32 0.0, %v173
  %v175 = vpop.f32.mrf.mxu0
  %176 = vdwg.mxu0
  %v178 = vsel %vm38, %v55, 0
  %v181 = vsel %vm38, %v56, 0
  %v184 = vsel %vm38, %v57, 0
  %v187 = vsel %vm38, %v58, 0
  %189 = vmatprep.subr.mxu0 0.0
  %190 = vmatpush1.msra.mxu0 0.0
  %191 = vmatprep.subr.mxu0 0.0
  %192 = vmatpush1.msra.mxu0 0.0
  %193 = vmatprep.subr.mxu0 0.0
  %194 = vmatpush1.msra.mxu0 0.0
  %195 = vmatprep.subr.mxu0 0.0
  %196 = vmatpush1.msra.mxu0 0.0
  %197 = vmatprep.subr.mxu0 0.0
  %198 = vmatpush1.msra.mxu0 0.0
  %199 = vmatprep.subr.mxu0 0.0
  %200 = vmatpush1.msra.mxu0 0.0
  %201 = vmatprep.subr.mxu0 0.0
  %202 = vmatpush1.msra.mxu0 0.0
  %203 = vmatprep.subr.mxu0 0.0
  %204 = vmatpush1.msra.mxu0 0.0
  %205 = vmatprep.subr.mxu0 0.0
  %206 = vmatpush1.msra.mxu0 %v66
  %207 = vmatprep.subr.mxu0 0.0
  %208 = vmatpush1.msra.mxu0 %v65
  %209 = vmatprep.subr.mxu0 0.0
  %210 = vmatpush1.msra.mxu0 %v64
  %211 = vmatprep.subr.mxu0 0.0
  %212 = vmatpush1.msra.mxu0 %v63
  %213 = vmatprep.subr.mxu0 0.0
  %214 = vmatpush1.msra.mxu0 %v62
  %215 = vmatprep.subr.mxu0 0.0
  %216 = vmatpush1.msra.mxu0 %v61
  %217 = vmatprep.subr.mxu0 0.0
  %218 = vmatpush1.msra.mxu0 %v60
  %219 = vmatprep.subr.mxu0 0.0
  %220 = vmatpush1.msra.mxu0 %v59
  %221 = vmatprep.subr.mxu0 0.0
  %222 = vmatpush2.msra.mxu0 0.0
  %223 = vmatprep.subr.mxu0 0.0
  %224 = vmatpush2.msra.mxu0 0.0
  %225 = vmatprep.subr.mxu0 0.0
  %226 = vmatpush2.msra.mxu0 0.0
  %227 = vmatprep.subr.mxu0 0.0
  %228 = vmatpush2.msra.mxu0 0.0
  %229 = vmatprep.subr.mxu0 0.0
  %230 = vmatpush2.msra.mxu0 0.0
  %231 = vmatprep.subr.mxu0 0.0
  %232 = vmatpush2.msra.mxu0 0.0
  %233 = vmatprep.subr.mxu0 0.0
  %234 = vmatpush2.msra.mxu0 0.0
  %235 = vmatprep.subr.mxu0 0.0
  %236 = vmatpush2.msra.mxu0 0.0
  %237 = vmatprep.subr.mxu0 0.0
  %238 = vmatpush2.msra.mxu0 0.0
  %239 = vmatprep.subr.mxu0 0.0
  %240 = vmatpush2.msra.mxu0 0.0
  %241 = vmatprep.subr.mxu0 0.0
  %242 = vmatpush2.msra.mxu0 0.0
  %243 = vmatprep.subr.mxu0 0.0
  %244 = vmatpush2.msra.mxu0 0.0
  %245 = vmatprep.subr.mxu0 0.0
  %246 = vmatpush2.msra.mxu0 0.0
  %247 = vmatprep.subr.mxu0 0.0
  %248 = vmatpush2.msra.mxu0 0.0
  %249 = vmatprep.subr.mxu0 0.0
  %250 = vmatpush2.msra.mxu0 0.0
  %251 = vmatprep.subr.mxu0 0.0
  %252 = vmatpush2.msra.mxu0 0.0
  %253 = vmatprep.mubr.f32.mxu0 0.0
  %254 = vmatmul.mubr.f32.gmra.mxu0 %v178
  %v255 = vpop.f32.mrf.mxu0
  %v256 = vadd.f32 %v159, %v255
  %v257 = vpop.f32.mrf.mxu0
  %258 = vmatprep.mubr.f32.mxu0 0.0
  %259 = vmatmul.mubr.f32.gmra.mxu0 %v181
  %v260 = vpop.f32.mrf.mxu0
  %v261 = vadd.f32 %v164, %v260
  %v262 = vpop.f32.mrf.mxu0
  %263 = vmatprep.mubr.f32.mxu0 0.0
  %264 = vmatmul.mubr.f32.gmra.mxu0 %v184
  %v265 = vpop.f32.mrf.mxu0
  %v266 = vadd.f32 %v169, %v265
  %v267 = vpop.f32.mrf.mxu0
  %268 = vmatprep.mubr.f32.mxu0 0.0
  %269 = vmatmul.mubr.f32.gmra.mxu0 %v187
  %v270 = vpop.f32.mrf.mxu0
  %v271 = vadd.f32 %v174, %v270
  %v272 = vpop.f32.mrf.mxu0
  %273 = vdwg.mxu0
  %v274 = vld [vmem:[#allocation2 + $0x2] sm:$0xff]
  %v275 = vld [vmem:[#allocation2 + $0xa] sm:$0xff]
  %v276 = vld [vmem:[#allocation2 + $0x1a] sm:$0xff]
  %v277 = vld [vmem:[#allocation2 + $0x22] sm:$0xff]
  %s278 = scalar_lea.vmem %s1, 128
  %v279 = vld [vmem:[%s278] sm:$0xff]
  %v280 = vld [vmem:[%s278 + $0x8] sm:$0xff]
  %v281 = vld [vmem:[%s278 + $0x10] sm:$0xff]
  %v282 = vld [vmem:[%s278 + $0x18] sm:$0xff]
  %v283 = vld [vmem:[%s278 + $0x20] sm:$0xff]
  %v284 = vld [vmem:[%s278 + $0x28] sm:$0xff]
  %v285 = vld [vmem:[%s278 + $0x30] sm:$0xff]
  %v286 = vld [vmem:[%s278 + $0x38] sm:$0xff]
  %v288 = vsel %vm38, %v274, 0
  %v291 = vsel %vm38, %v275, 0
  %v294 = vsel %vm38, %v276, 0
  %v297 = vsel %vm38, %v277, 0
  %299 = vmatprep.subr.mxu0 0.0
  %300 = vmatpush1.msra.mxu0 0.0
  %301 = vmatprep.subr.mxu0 0.0
  %302 = vmatpush1.msra.mxu0 0.0
  %303 = vmatprep.subr.mxu0 0.0
  %304 = vmatpush1.msra.mxu0 0.0
  %305 = vmatprep.subr.mxu0 0.0
  %306 = vmatpush1.msra.mxu0 0.0
  %307 = vmatprep.subr.mxu0 0.0
  %308 = vmatpush1.msra.mxu0 0.0
  %309 = vmatprep.subr.mxu0 0.0
  %310 = vmatpush1.msra.mxu0 0.0
  %311 = vmatprep.subr.mxu0 0.0
  %312 = vmatpush1.msra.mxu0 0.0
  %313 = vmatprep.subr.mxu0 0.0
  %314 = vmatpush1.msra.mxu0 0.0
  %315 = vmatprep.subr.mxu0 0.0
  %316 = vmatpush1.msra.mxu0 %v286
  %317 = vmatprep.subr.mxu0 0.0
  %318 = vmatpush1.msra.mxu0 %v285
  %319 = vmatprep.subr.mxu0 0.0
  %320 = vmatpush1.msra.mxu0 %v284
  %321 = vmatprep.subr.mxu0 0.0
  %322 = vmatpush1.msra.mxu0 %v283
  %323 = vmatprep.subr.mxu0 0.0
  %324 = vmatpush1.msra.mxu0 %v282
  %325 = vmatprep.subr.mxu0 0.0
  %326 = vmatpush1.msra.mxu0 %v281
  %327 = vmatprep.subr.mxu0 0.0
  %328 = vmatpush1.msra.mxu0 %v280
  %329 = vmatprep.subr.mxu0 0.0
  %330 = vmatpush1.msra.mxu0 %v279
  %331 = vmatprep.subr.mxu0 0.0
  %332 = vmatpush2.msra.mxu0 0.0
  %333 = vmatprep.subr.mxu0 0.0
  %334 = vmatpush2.msra.mxu0 0.0
  %335 = vmatprep.subr.mxu0 0.0
  %336 = vmatpush2.msra.mxu0 0.0
  %337 = vmatprep.subr.mxu0 0.0
  %338 = vmatpush2.msra.mxu0 0.0
  %339 = vmatprep.subr.mxu0 0.0
  %340 = vmatpush2.msra.mxu0 0.0
  %341 = vmatprep.subr.mxu0 0.0
  %342 = vmatpush2.msra.mxu0 0.0
  %343 = vmatprep.subr.mxu0 0.0
  %344 = vmatpush2.msra.mxu0 0.0
  %345 = vmatprep.subr.mxu0 0.0
  %346 = vmatpush2.msra.mxu0 0.0
  %347 = vmatprep.subr.mxu0 0.0
  %348 = vmatpush2.msra.mxu0 0.0
  %349 = vmatprep.subr.mxu0 0.0
  %350 = vmatpush2.msra.mxu0 0.0
  %351 = vmatprep.subr.mxu0 0.0
  %352 = vmatpush2.msra.mxu0 0.0
  %353 = vmatprep.subr.mxu0 0.0
  %354 = vmatpush2.msra.mxu0 0.0
  %355 = vmatprep.subr.mxu0 0.0
  %356 = vmatpush2.msra.mxu0 0.0
  %357 = vmatprep.subr.mxu0 0.0
  %358 = vmatpush2.msra.mxu0 0.0
  %359 = vmatprep.subr.mxu0 0.0
  %360 = vmatpush2.msra.mxu0 0.0
  %361 = vmatprep.subr.mxu0 0.0
  %362 = vmatpush2.msra.mxu0 0.0
  %363 = vmatprep.mubr.f32.mxu0 0.0
  %364 = vmatmul.mubr.f32.gmra.mxu0 %v288
  %v365 = vpop.f32.mrf.mxu0
  %v366 = vadd.f32 0.0, %v365
  %v367 = vpop.f32.mrf.mxu0
  %368 = vmatprep.mubr.f32.mxu0 0.0
  %369 = vmatmul.mubr.f32.gmra.mxu0 %v291
  %v370 = vpop.f32.mrf.mxu0
  %v371 = vadd.f32 0.0, %v370
  %v372 = vpop.f32.mrf.mxu0
  %373 = vmatprep.mubr.f32.mxu0 0.0
  %374 = vmatmul.mubr.f32.gmra.mxu0 %v294
  %v375 = vpop.f32.mrf.mxu0
  %v376 = vadd.f32 0.0, %v375
  %v377 = vpop.f32.mrf.mxu0
  %378 = vmatprep.mubr.f32.mxu0 0.0
  %379 = vmatmul.mubr.f32.gmra.mxu0 %v297
  %v380 = vpop.f32.mrf.mxu0
  %v381 = vadd.f32 0.0, %v380
  %v382 = vpop.f32.mrf.mxu0
  %383 = vdwg.mxu0
  %v384 = vadd.f32 %v256, %v366
  %v385 = vadd.f32 %v261, %v371
  %v386 = vadd.f32 %v266, %v376
  %v387 = vadd.f32 %v271, %v381
  %v388 = vld [vmem:[%s4] sm:$0x1]
  %v389 = vld [vmem:[%s5] sm:$0x1]
  %v390 = vadd.f32 %v384, %v385
  %v391 = vadd.f32 %v390, %v386
  %v392 = vadd.f32 %v391, %v387
  %v393 = vrot.slane %v392, 4
  %v394 = vadd.f32 %v392, %v393
  %v395 = vrot.slane %v394, 2
  %v396 = vadd.f32 %v394, %v395
  %v397 = vrot.slane %v396, 1
  %v398 = vadd.f32 %v396, %v397
  %399 = vrot.lane.b32.xlu0 %v398, 8
  %v400 = vpop.permute.xlu0 %399
  %v401 = vadd.f32 %v398, %v400
  %402 = vrot.lane.b32.xlu0 %v401, 16
  %v403 = vpop.permute.xlu0 %402
  %v404 = vadd.f32 %v401, %v403
  %405 = vrot.lane.b32.xlu0 %v404, 32
  %v406 = vpop.permute.xlu0 %405
  %v407 = vadd.f32 %v404, %v406
  %408 = vrot.lane.b32.xlu0 %v407, 64
  %v409 = vpop.permute.xlu0 %408
  %v410 = vadd.f32 %v407, %v409
  %v411 = vmul.f32 %v410, 0.001953125
  %v412 = vlaneseq
  %v413 = vshrl.u32 %v412, 7
  %v414 = vsub.s32 0, %v413
  %v415 = vrot.slane %v411, %v414
  %v416 = vsub.f32 %v384, %v415
  %v417 = vsub.f32 %v385, %v415
  %v418 = vsub.f32 %v386, %v415
  %v419 = vsub.f32 %v387, %v415
  %v420 = vmul.f32 %v416, %v416
  %v421 = vmul.f32 %v417, %v417
  %v422 = vmul.f32 %v418, %v418
  %v423 = vmul.f32 %v419, %v419
  %v424 = vadd.f32 %v420, %v421
  %v425 = vadd.f32 %v424, %v422
  %v426 = vadd.f32 %v425, %v423
  %v427 = vrot.slane %v426, 4
  %v428 = vadd.f32 %v426, %v427
  %v429 = vrot.slane %v428, 2
  %v430 = vadd.f32 %v428, %v429
  %v431 = vrot.slane %v430, 1
  %v432 = vadd.f32 %v430, %v431
  %433 = vrot.lane.b32.xlu0 %v432, 8
  %v434 = vpop.permute.xlu0 %433
  %v435 = vadd.f32 %v432, %v434
  %436 = vrot.lane.b32.xlu0 %v435, 16
  %v437 = vpop.permute.xlu0 %436
  %v438 = vadd.f32 %v435, %v437
  %439 = vrot.lane.b32.xlu0 %v438, 32
  %v440 = vpop.permute.xlu0 %439
  %v441 = vadd.f32 %v438, %v440
  %442 = vrot.lane.b32.xlu0 %v441, 64
  %v443 = vpop.permute.xlu0 %442
  %v444 = vadd.f32 %v441, %v443
  %v445 = vmul.f32 %v444, 0.001953125
  %v446 = vadd.f32 %v445, 0.0001
  %v447 = vrsqrt.pop %v446
  %v448 = vmul.f32 %v388, %v447
  %v449 = vmul.f32 %v411, %v448
  %v450 = vsub.f32 %v389, %v449
  %v452 = vlaneseq
  %v453 = vshrl.u32 %v452, 7
  %v454 = vsub.s32 0, %v453
  %v455 = vrot.slane %v448, %v454
  %v457 = vmul.f32 %v384, %v455
  %v458 = vmul.f32 %v385, %v455
  %v459 = vmul.f32 %v386, %v455
  %v460 = vmul.f32 %v387, %v455
  %v462 = vlaneseq
  %v463 = vshrl.u32 %v462, 7
  %v464 = vsub.s32 0, %v463
  %v465 = vrot.slane %v450, %v464
  %v467 = vadd.f32 %v457, %v465
  %v468 = vadd.f32 %v458, %v465
  %v469 = vadd.f32 %v459, %v465
  %v470 = vadd.f32 %v460, %v465
  %vm471 = vcmp.gt.f32.partialorder %v467, 0.0
  %vm472 = vcmp.gt.f32.partialorder %v468, 0.0
  %vm473 = vcmp.gt.f32.partialorder %v469, 0.0
  %vm474 = vcmp.gt.f32.partialorder %v470, 0.0
  %v475 = vmul.f32 %v467, 0.2
  %v476 = vmul.f32 %v468, 0.2
  %v477 = vmul.f32 %v469, 0.2
  %v478 = vmul.f32 %v470, 0.2
  %v479 = vsel %vm471, %v467, %v475
  %v480 = vsel %vm472, %v468, %v476
  %v481 = vsel %vm473, %v469, %v477
  %v482 = vsel %vm474, %v470, %v478
  %483 = vst [vmem:[#allocation3] sm:$0x1] 0.0
  %484 = vst [vmem:[#allocation3 + $0x18] sm:$0x1] 0.0
  %485 = vst [vmem:[#allocation3 + $0x11] sm:$0x1] 0.0
  %486 = vst [vmem:[#allocation3 + $0x29] sm:$0x1] 0.0
  %487 = vst [vmem:[#allocation3 + $0x1] sm:$0xff] %v479
  %488 = vst [vmem:[#allocation3 + $0x9] sm:$0xff] %v480
  %489 = vst [vmem:[#allocation3 + $0x19] sm:$0xff] %v481
  %490 = vst [vmem:[#allocation3 + $0x21] sm:$0xff] %v482
  %v491 = vld [vmem:[#allocation3] sm:$0xff]
  %v492 = vld [vmem:[#allocation3 + $0x8] sm:$0xff]
  %v493 = vld [vmem:[#allocation3 + $0x18] sm:$0xff]
  %v494 = vld [vmem:[#allocation3 + $0x20] sm:$0xff]
  %v495 = vld [vmem:[%s2] sm:$0xff]
  %v496 = vld [vmem:[%s2 + $0x8] sm:$0xff]
  %v497 = vld [vmem:[%s2 + $0x10] sm:$0xff]
  %v498 = vld [vmem:[%s2 + $0x18] sm:$0xff]
  %v499 = vld [vmem:[%s2 + $0x20] sm:$0xff]
  %v500 = vld [vmem:[%s2 + $0x28] sm:$0xff]
  %v501 = vld [vmem:[%s2 + $0x30] sm:$0xff]
  %v502 = vld [vmem:[%s2 + $0x38] sm:$0xff]
  %v503 = vld [vmem:[%s2 + $0x40] sm:$0xff]
  %v504 = vld [vmem:[%s2 + $0x48] sm:$0xff]
  %v505 = vld [vmem:[%s2 + $0x50] sm:$0xff]
  %v506 = vld [vmem:[%s2 + $0x58] sm:$0xff]
  %v507 = vld [vmem:[%s2 + $0x60] sm:$0xff]
  %v508 = vld [vmem:[%s2 + $0x68] sm:$0xff]
  %v509 = vld [vmem:[%s2 + $0x70] sm:$0xff]
  %v510 = vld [vmem:[%s2 + $0x78] sm:$0xff]
  %v511 = vld [vmem:[#allocation3 + $0x1] sm:$0xff]
  %v512 = vld [vmem:[#allocation3 + $0x9] sm:$0xff]
  %v513 = vld [vmem:[#allocation3 + $0x19] sm:$0xff]
  %v514 = vld [vmem:[#allocation3 + $0x21] sm:$0xff]
  %s515 = scalar_lea.vmem %s2, 128
  %v516 = vld [vmem:[%s515] sm:$0xff]
  %v517 = vld [vmem:[%s515 + $0x8] sm:$0xff]
  %v518 = vld [vmem:[%s515 + $0x10] sm:$0xff]
  %v519 = vld [vmem:[%s515 + $0x18] sm:$0xff]
  %v520 = vld [vmem:[%s515 + $0x20] sm:$0xff]
  %v521 = vld [vmem:[%s515 + $0x28] sm:$0xff]
  %v522 = vld [vmem:[%s515 + $0x30] sm:$0xff]
  %v523 = vld [vmem:[%s515 + $0x38] sm:$0xff]
  %v524 = vld [vmem:[%s515 + $0x40] sm:$0xff]
  %v525 = vld [vmem:[%s515 + $0x48] sm:$0xff]
  %v526 = vld [vmem:[%s515 + $0x50] sm:$0xff]
  %v527 = vld [vmem:[%s515 + $0x58] sm:$0xff]
  %v528 = vld [vmem:[%s515 + $0x60] sm:$0xff]
  %v529 = vld [vmem:[%s515 + $0x68] sm:$0xff]
  %v530 = vld [vmem:[%s515 + $0x70] sm:$0xff]
  %v531 = vld [vmem:[%s515 + $0x78] sm:$0xff]
  %532 = vmatprep.subr.mxu0 0.0
  %533 = vmatpush1.msra.mxu0 %v531
  %534 = vmatprep.subr.mxu0 0.0
  %535 = vmatpush1.msra.mxu0 %v530
  %536 = vmatprep.subr.mxu0 0.0
  %537 = vmatpush1.msra.mxu0 %v529
  %538 = vmatprep.subr.mxu0 0.0
  %539 = vmatpush1.msra.mxu0 %v528
  %540 = vmatprep.subr.mxu0 0.0
  %541 = vmatpush1.msra.mxu0 %v527
  %542 = vmatprep.subr.mxu0 0.0
  %543 = vmatpush1.msra.mxu0 %v526
  %544 = vmatprep.subr.mxu0 0.0
  %545 = vmatpush1.msra.mxu0 %v525
  %546 = vmatprep.subr.mxu0 0.0
  %547 = vmatpush1.msra.mxu0 %v524
  %548 = vmatprep.subr.mxu0 0.0
  %549 = vmatpush1.msra.mxu0 %v523
  %550 = vmatprep.subr.mxu0 0.0
  %551 = vmatpush1.msra.mxu0 %v522
  %552 = vmatprep.subr.mxu0 0.0
  %553 = vmatpush1.msra.mxu0 %v521
  %554 = vmatprep.subr.mxu0 0.0
  %555 = vmatpush1.msra.mxu0 %v520
  %556 = vmatprep.subr.mxu0 0.0
  %557 = vmatpush1.msra.mxu0 %v519
  %558 = vmatprep.subr.mxu0 0.0
  %559 = vmatpush1.msra.mxu0 %v518
  %560 = vmatprep.subr.mxu0 0.0
  %561 = vmatpush1.msra.mxu0 %v517
  %562 = vmatprep.subr.mxu0 0.0
  %563 = vmatpush1.msra.mxu0 %v516
  %564 = vmatprep.subr.mxu0 0.0
  %565 = vmatpush2.msra.mxu0 0.0
  %566 = vmatprep.subr.mxu0 0.0
  %567 = vmatpush2.msra.mxu0 0.0
  %568 = vmatprep.subr.mxu0 0.0
  %569 = vmatpush2.msra.mxu0 0.0
  %570 = vmatprep.subr.mxu0 0.0
  %571 = vmatpush2.msra.mxu0 0.0
  %572 = vmatprep.subr.mxu0 0.0
  %573 = vmatpush2.msra.mxu0 0.0
  %574 = vmatprep.subr.mxu0 0.0
  %575 = vmatpush2.msra.mxu0 0.0
  %576 = vmatprep.subr.mxu0 0.0
  %577 = vmatpush2.msra.mxu0 0.0
  %578 = vmatprep.subr.mxu0 0.0
  %579 = vmatpush2.msra.mxu0 0.0
  %580 = vmatprep.subr.mxu0 0.0
  %581 = vmatpush2.msra.mxu0 0.0
  %582 = vmatprep.subr.mxu0 0.0
  %583 = vmatpush2.msra.mxu0 0.0
  %584 = vmatprep.subr.mxu0 0.0
  %585 = vmatpush2.msra.mxu0 0.0
  %586 = vmatprep.subr.mxu0 0.0
  %587 = vmatpush2.msra.mxu0 0.0
  %588 = vmatprep.subr.mxu0 0.0
  %589 = vmatpush2.msra.mxu0 0.0
  %590 = vmatprep.subr.mxu0 0.0
  %591 = vmatpush2.msra.mxu0 0.0
  %592 = vmatprep.subr.mxu0 0.0
  %593 = vmatpush2.msra.mxu0 0.0
  %594 = vmatprep.subr.mxu0 0.0
  %595 = vmatpush2.msra.mxu0 0.0
  %596 = vmatprep.mubr.f32.mxu0 0.0
  %597 = vmatmul.mubr.f32.gmra.mxu0 %v511
  %v598 = vpop.f32.mrf.mxu0
  %v599 = vadd.f32 0.0, %v598
  %v600 = vpop.f32.mrf.mxu0
  %601 = vmatprep.mubr.f32.mxu0 0.0
  %602 = vmatmul.mubr.f32.gmra.mxu0 %v512
  %v603 = vpop.f32.mrf.mxu0
  %v604 = vadd.f32 0.0, %v603
  %v605 = vpop.f32.mrf.mxu0
  %606 = vmatprep.mubr.f32.mxu0 0.0
  %607 = vmatmul.mubr.f32.gmra.mxu0 %v513
  %v608 = vpop.f32.mrf.mxu0
  %v609 = vadd.f32 0.0, %v608
  %v610 = vpop.f32.mrf.mxu0
  %611 = vmatprep.mubr.f32.mxu0 0.0
  %612 = vmatmul.mubr.f32.gmra.mxu0 %v514
  %v613 = vpop.f32.mrf.mxu0
  %v614 = vadd.f32 0.0, %v613
  %v615 = vpop.f32.mrf.mxu0
  %616 = vdwg.mxu0
  %617 = vmatprep.subr.mxu0 0.0
  %618 = vmatpush1.msra.mxu0 %v510
  %619 = vmatprep.subr.mxu0 0.0
  %620 = vmatpush1.msra.mxu0 %v509
  %621 = vmatprep.subr.mxu0 0.0
  %622 = vmatpush1.msra.mxu0 %v508
  %623 = vmatprep.subr.mxu0 0.0
  %624 = vmatpush1.msra.mxu0 %v507
  %625 = vmatprep.subr.mxu0 0.0
  %626 = vmatpush1.msra.mxu0 %v506
  %627 = vmatprep.subr.mxu0 0.0
  %628 = vmatpush1.msra.mxu0 %v505
  %629 = vmatprep.subr.mxu0 0.0
  %630 = vmatpush1.msra.mxu0 %v504
  %631 = vmatprep.subr.mxu0 0.0
  %632 = vmatpush1.msra.mxu0 %v503
  %633 = vmatprep.subr.mxu0 0.0
  %634 = vmatpush1.msra.mxu0 %v502
  %635 = vmatprep.subr.mxu0 0.0
  %636 = vmatpush1.msra.mxu0 %v501
  %637 = vmatprep.subr.mxu0 0.0
  %638 = vmatpush1.msra.mxu0 %v500
  %639 = vmatprep.subr.mxu0 0.0
  %640 = vmatpush1.msra.mxu0 %v499
  %641 = vmatprep.subr.mxu0 0.0
  %642 = vmatpush1.msra.mxu0 %v498
  %643 = vmatprep.subr.mxu0 0.0
  %644 = vmatpush1.msra.mxu0 %v497
  %645 = vmatprep.subr.mxu0 0.0
  %646 = vmatpush1.msra.mxu0 %v496
  %647 = vmatprep.subr.mxu0 0.0
  %648 = vmatpush1.msra.mxu0 %v495
  %649 = vmatprep.subr.mxu0 0.0
  %650 = vmatpush2.msra.mxu0 0.0
  %651 = vmatprep.subr.mxu0 0.0
  %652 = vmatpush2.msra.mxu0 0.0
  %653 = vmatprep.subr.mxu0 0.0
  %654 = vmatpush2.msra.mxu0 0.0
  %655 = vmatprep.subr.mxu0 0.0
  %656 = vmatpush2.msra.mxu0 0.0
  %657 = vmatprep.subr.mxu0 0.0
  %658 = vmatpush2.msra.mxu0 0.0
  %659 = vmatprep.subr.mxu0 0.0
  %660 = vmatpush2.msra.mxu0 0.0
  %661 = vmatprep.subr.mxu0 0.0
  %662 = vmatpush2.msra.mxu0 0.0
  %663 = vmatprep.subr.mxu0 0.0
  %664 = vmatpush2.msra.mxu0 0.0
  %665 = vmatprep.subr.mxu0 0.0
  %666 = vmatpush2.msra.mxu0 0.0
  %667 = vmatprep.subr.mxu0 0.0
  %668 = vmatpush2.msra.mxu0 0.0
  %669 = vmatprep.subr.mxu0 0.0
  %670 = vmatpush2.msra.mxu0 0.0
  %671 = vmatprep.subr.mxu0 0.0
  %672 = vmatpush2.msra.mxu0 0.0
  %673 = vmatprep.subr.mxu0 0.0
  %674 = vmatpush2.msra.mxu0 0.0
  %675 = vmatprep.subr.mxu0 0.0
  %676 = vmatpush2.msra.mxu0 0.0
  %677 = vmatprep.subr.mxu0 0.0
  %678 = vmatpush2.msra.mxu0 0.0
  %679 = vmatprep.subr.mxu0 0.0
  %680 = vmatpush2.msra.mxu0 0.0
  %681 = vmatprep.mubr.f32.mxu0 0.0
  %682 = vmatmul.mubr.f32.gmra.mxu0 %v491
  %v683 = vpop.f32.mrf.mxu0
  %v684 = vadd.f32 %v599, %v683
  %v685 = vpop.f32.mrf.mxu0
  %686 = vmatprep.mubr.f32.mxu0 0.0
  %687 = vmatmul.mubr.f32.gmra.mxu0 %v492
  %v688 = vpop.f32.mrf.mxu0
  %v689 = vadd.f32 %v604, %v688
  %v690 = vpop.f32.mrf.mxu0
  %691 = vmatprep.mubr.f32.mxu0 0.0
  %692 = vmatmul.mubr.f32.gmra.mxu0 %v493
  %v693 = vpop.f32.mrf.mxu0
  %v694 = vadd.f32 %v609, %v693
  %v695 = vpop.f32.mrf.mxu0
  %696 = vmatprep.mubr.f32.mxu0 0.0
  %697 = vmatmul.mubr.f32.gmra.mxu0 %v494
  %v698 = vpop.f32.mrf.mxu0
  %v699 = vadd.f32 %v614, %v698
  %v700 = vpop.f32.mrf.mxu0
  %701 = vdwg.mxu0
  %v702 = vld [vmem:[#allocation3 + $0x2] sm:$0xff]
  %v703 = vld [vmem:[#allocation3 + $0xa] sm:$0xff]
  %v704 = vld [vmem:[#allocation3 + $0x1a] sm:$0xff]
  %v705 = vld [vmem:[#allocation3 + $0x22] sm:$0xff]
  %s706 = scalar_lea.vmem %s2, 256
  %v707 = vld [vmem:[%s706] sm:$0xff]
  %v708 = vld [vmem:[%s706 + $0x8] sm:$0xff]
  %v709 = vld [vmem:[%s706 + $0x10] sm:$0xff]
  %v710 = vld [vmem:[%s706 + $0x18] sm:$0xff]
  %v711 = vld [vmem:[%s706 + $0x20] sm:$0xff]
  %v712 = vld [vmem:[%s706 + $0x28] sm:$0xff]
  %v713 = vld [vmem:[%s706 + $0x30] sm:$0xff]
  %v714 = vld [vmem:[%s706 + $0x38] sm:$0xff]
  %v715 = vld [vmem:[%s706 + $0x40] sm:$0xff]
  %v716 = vld [vmem:[%s706 + $0x48] sm:$0xff]
  %v717 = vld [vmem:[%s706 + $0x50] sm:$0xff]
  %v718 = vld [vmem:[%s706 + $0x58] sm:$0xff]
  %v719 = vld [vmem:[%s706 + $0x60] sm:$0xff]
  %v720 = vld [vmem:[%s706 + $0x68] sm:$0xff]
  %v721 = vld [vmem:[%s706 + $0x70] sm:$0xff]
  %v722 = vld [vmem:[%s706 + $0x78] sm:$0xff]
  %723 = vmatprep.subr.mxu0 0.0
  %724 = vmatpush1.msra.mxu0 %v722
  %725 = vmatprep.subr.mxu0 0.0
  %726 = vmatpush1.msra.mxu0 %v721
  %727 = vmatprep.subr.mxu0 0.0
  %728 = vmatpush1.msra.mxu0 %v720
  %729 = vmatprep.subr.mxu0 0.0
  %730 = vmatpush1.msra.mxu0 %v719
  %731 = vmatprep.subr.mxu0 0.0
  %732 = vmatpush1.msra.mxu0 %v718
  %733 = vmatprep.subr.mxu0 0.0
  %734 = vmatpush1.msra.mxu0 %v717
  %735 = vmatprep.subr.mxu0 0.0
  %736 = vmatpush1.msra.mxu0 %v716
  %737 = vmatprep.subr.mxu0 0.0
  %738 = vmatpush1.msra.mxu0 %v715
  %739 = vmatprep.subr.mxu0 0.0
  %740 = vmatpush1.msra.mxu0 %v714
  %741 = vmatprep.subr.mxu0 0.0
  %742 = vmatpush1.msra.mxu0 %v713
  %743 = vmatprep.subr.mxu0 0.0
  %744 = vmatpush1.msra.mxu0 %v712
  %745 = vmatprep.subr.mxu0 0.0
  %746 = vmatpush1.msra.mxu0 %v711
  %747 = vmatprep.subr.mxu0 0.0
  %748 = vmatpush1.msra.mxu0 %v710
  %749 = vmatprep.subr.mxu0 0.0
  %750 = vmatpush1.msra.mxu0 %v709
  %751 = vmatprep.subr.mxu0 0.0
  %752 = vmatpush1.msra.mxu0 %v708
  %753 = vmatprep.subr.mxu0 0.0
  %754 = vmatpush1.msra.mxu0 %v707
  %755 = vmatprep.subr.mxu0 0.0
  %756 = vmatpush2.msra.mxu0 0.0
  %757 = vmatprep.subr.mxu0 0.0
  %758 = vmatpush2.msra.mxu0 0.0
  %759 = vmatprep.subr.mxu0 0.0
  %760 = vmatpush2.msra.mxu0 0.0
  %761 = vmatprep.subr.mxu0 0.0
  %762 = vmatpush2.msra.mxu0 0.0
  %763 = vmatprep.subr.mxu0 0.0
  %764 = vmatpush2.msra.mxu0 0.0
  %765 = vmatprep.subr.mxu0 0.0
  %766 = vmatpush2.msra.mxu0 0.0
  %767 = vmatprep.subr.mxu0 0.0
  %768 = vmatpush2.msra.mxu0 0.0
  %769 = vmatprep.subr.mxu0 0.0
  %770 = vmatpush2.msra.mxu0 0.0
  %771 = vmatprep.subr.mxu0 0.0
  %772 = vmatpush2.msra.mxu0 0.0
  %773 = vmatprep.subr.mxu0 0.0
  %774 = vmatpush2.msra.mxu0 0.0
  %775 = vmatprep.subr.mxu0 0.0
  %776 = vmatpush2.msra.mxu0 0.0
  %777 = vmatprep.subr.mxu0 0.0
  %778 = vmatpush2.msra.mxu0 0.0
  %779 = vmatprep.subr.mxu0 0.0
  %780 = vmatpush2.msra.mxu0 0.0
  %781 = vmatprep.subr.mxu0 0.0
  %782 = vmatpush2.msra.mxu0 0.0
  %783 = vmatprep.subr.mxu0 0.0
  %784 = vmatpush2.msra.mxu0 0.0
  %785 = vmatprep.subr.mxu0 0.0
  %786 = vmatpush2.msra.mxu0 0.0
  %787 = vmatprep.mubr.f32.mxu0 0.0
  %788 = vmatmul.mubr.f32.gmra.mxu0 %v702
  %v789 = vpop.f32.mrf.mxu0
  %v790 = vadd.f32 0.0, %v789
  %v791 = vpop.f32.mrf.mxu0
  %792 = vmatprep.mubr.f32.mxu0 0.0
  %793 = vmatmul.mubr.f32.gmra.mxu0 %v703
  %v794 = vpop.f32.mrf.mxu0
  %v795 = vadd.f32 0.0, %v794
  %v796 = vpop.f32.mrf.mxu0
  %797 = vmatprep.mubr.f32.mxu0 0.0
  %798 = vmatmul.mubr.f32.gmra.mxu0 %v704
  %v799 = vpop.f32.mrf.mxu0
  %v800 = vadd.f32 0.0, %v799
  %v801 = vpop.f32.mrf.mxu0
  %802 = vmatprep.mubr.f32.mxu0 0.0
  %803 = vmatmul.mubr.f32.gmra.mxu0 %v705
  %v804 = vpop.f32.mrf.mxu0
  %v805 = vadd.f32 0.0, %v804
  %v806 = vpop.f32.mrf.mxu0
  %807 = vdwg.mxu0
  %v808 = vadd.f32 %v684, %v790
  %v809 = vadd.f32 %v689, %v795
  %v810 = vadd.f32 %v694, %v800
  %v811 = vadd.f32 %v699, %v805
  %v812 = vld [vmem:[%s6] sm:$0x1]
  %v813 = vld [vmem:[%s7] sm:$0x1]
  %v814 = vadd.f32 %v808, %v809
  %v815 = vadd.f32 %v814, %v810
  %v816 = vadd.f32 %v815, %v811
  %v817 = vrot.slane %v816, 4
  %v818 = vadd.f32 %v816, %v817
  %v819 = vrot.slane %v818, 2
  %v820 = vadd.f32 %v818, %v819
  %v821 = vrot.slane %v820, 1
  %v822 = vadd.f32 %v820, %v821
  %823 = vrot.lane.b32.xlu0 %v822, 8
  %v824 = vpop.permute.xlu0 %823
  %v825 = vadd.f32 %v822, %v824
  %826 = vrot.lane.b32.xlu0 %v825, 16
  %v827 = vpop.permute.xlu0 %826
  %v828 = vadd.f32 %v825, %v827
  %829 = vrot.lane.b32.xlu0 %v828, 32
  %v830 = vpop.permute.xlu0 %829
  %v831 = vadd.f32 %v828, %v830
  %832 = vrot.lane.b32.xlu0 %v831, 64
  %v833 = vpop.permute.xlu0 %832
  %v834 = vadd.f32 %v831, %v833
  %v835 = vmul.f32 %v834, 0.001953125
  %v836 = vlaneseq
  %v837 = vshrl.u32 %v836, 7
  %v838 = vsub.s32 0, %v837
  %v839 = vrot.slane %v835, %v838
  %v840 = vsub.f32 %v808, %v839
  %v841 = vsub.f32 %v809, %v839
  %v842 = vsub.f32 %v810, %v839
  %v843 = vsub.f32 %v811, %v839
  %v844 = vmul.f32 %v840, %v840
  %v845 = vmul.f32 %v841, %v841
  %v846 = vmul.f32 %v842, %v842
  %v847 = vmul.f32 %v843, %v843
  %v848 = vadd.f32 %v844, %v845
  %v849 = vadd.f32 %v848, %v846
  %v850 = vadd.f32 %v849, %v847
  %v851 = vrot.slane %v850, 4
  %v852 = vadd.f32 %v850, %v851
  %v853 = vrot.slane %v852, 2
  %v854 = vadd.f32 %v852, %v853
  %v855 = vrot.slane %v854, 1
  %v856 = vadd.f32 %v854, %v855
  %857 = vrot.lane.b32.xlu0 %v856, 8
  %v858 = vpop.permute.xlu0 %857
  %v859 = vadd.f32 %v856, %v858
  %860 = vrot.lane.b32.xlu0 %v859, 16
  %v861 = vpop.permute.xlu0 %860
  %v862 = vadd.f32 %v859, %v861
  %863 = vrot.lane.b32.xlu0 %v862, 32
  %v864 = vpop.permute.xlu0 %863
  %v865 = vadd.f32 %v862, %v864
  %866 = vrot.lane.b32.xlu0 %v865, 64
  %v867 = vpop.permute.xlu0 %866
  %v868 = vadd.f32 %v865, %v867
  %v869 = vmul.f32 %v868, 0.001953125
  %v870 = vadd.f32 %v869, 0.0001
  %v871 = vrsqrt.pop %v870
  %v872 = vmul.f32 %v812, %v871
  %v873 = vmul.f32 %v835, %v872
  %v874 = vsub.f32 %v813, %v873
  %v876 = vlaneseq
  %v877 = vshrl.u32 %v876, 7
  %v878 = vsub.s32 0, %v877
  %v879 = vrot.slane %v872, %v878
  %v881 = vmul.f32 %v808, %v879
  %v882 = vmul.f32 %v809, %v879
  %v883 = vmul.f32 %v810, %v879
  %v884 = vmul.f32 %v811, %v879
  %v886 = vlaneseq
  %v887 = vshrl.u32 %v886, 7
  %v888 = vsub.s32 0, %v887
  %v889 = vrot.slane %v874, %v888
  %v891 = vadd.f32 %v881, %v889
  %v892 = vadd.f32 %v882, %v889
  %v893 = vadd.f32 %v883, %v889
  %v894 = vadd.f32 %v884, %v889
  %v896 = vsel %vm38, %v43, 0
  %v899 = vsel %vm38, %v44, 0
  %v902 = vsel %vm38, %v45, 0
  %v905 = vsel %vm38, %v46, 0
  %907 = vmatprep.subr.mxu0 0.0
  %908 = vmatpush1.msra.mxu0 0.0
  %909 = vmatprep.subr.mxu0 0.0
  %910 = vmatpush1.msra.mxu0 0.0
  %911 = vmatprep.subr.mxu0 0.0
  %912 = vmatpush1.msra.mxu0 0.0
  %913 = vmatprep.subr.mxu0 0.0
  %914 = vmatpush1.msra.mxu0 0.0
  %915 = vmatprep.subr.mxu0 0.0
  %916 = vmatpush1.msra.mxu0 0.0
  %917 = vmatprep.subr.mxu0 0.0
  %918 = vmatpush1.msra.mxu0 0.0
  %919 = vmatprep.subr.mxu0 0.0
  %920 = vmatpush1.msra.mxu0 0.0
  %921 = vmatprep.subr.mxu0 0.0
  %922 = vmatpush1.msra.mxu0 0.0
  %923 = vmatprep.subr.mxu0 0.0
  %924 = vmatpush1.msra.mxu0 %v54
  %925 = vmatprep.subr.mxu0 0.0
  %926 = vmatpush1.msra.mxu0 %v53
  %927 = vmatprep.subr.mxu0 0.0
  %928 = vmatpush1.msra.mxu0 %v52
  %929 = vmatprep.subr.mxu0 0.0
  %930 = vmatpush1.msra.mxu0 %v51
  %931 = vmatprep.subr.mxu0 0.0
  %932 = vmatpush1.msra.mxu0 %v50
  %933 = vmatprep.subr.mxu0 0.0
  %934 = vmatpush1.msra.mxu0 %v49
  %935 = vmatprep.subr.mxu0 0.0
  %936 = vmatpush1.msra.mxu0 %v48
  %937 = vmatprep.subr.mxu0 0.0
  %938 = vmatpush1.msra.mxu0 %v47
  %939 = vmatprep.subr.mxu0 0.0
  %940 = vmatpush2.msra.mxu0 0.0
  %941 = vmatprep.subr.mxu0 0.0
  %942 = vmatpush2.msra.mxu0 0.0
  %943 = vmatprep.subr.mxu0 0.0
  %944 = vmatpush2.msra.mxu0 0.0
  %945 = vmatprep.subr.mxu0 0.0
  %946 = vmatpush2.msra.mxu0 0.0
  %947 = vmatprep.subr.mxu0 0.0
  %948 = vmatpush2.msra.mxu0 0.0
  %949 = vmatprep.subr.mxu0 0.0
  %950 = vmatpush2.msra.mxu0 0.0
  %951 = vmatprep.subr.mxu0 0.0
  %952 = vmatpush2.msra.mxu0 0.0
  %953 = vmatprep.subr.mxu0 0.0
  %954 = vmatpush2.msra.mxu0 0.0
  %955 = vmatprep.subr.mxu0 0.0
  %956 = vmatpush2.msra.mxu0 0.0
  %957 = vmatprep.subr.mxu0 0.0
  %958 = vmatpush2.msra.mxu0 0.0
  %959 = vmatprep.subr.mxu0 0.0
  %960 = vmatpush2.msra.mxu0 0.0
  %961 = vmatprep.subr.mxu0 0.0
  %962 = vmatpush2.msra.mxu0 0.0
  %963 = vmatprep.subr.mxu0 0.0
  %964 = vmatpush2.msra.mxu0 0.0
  %965 = vmatprep.subr.mxu0 0.0
  %966 = vmatpush2.msra.mxu0 0.0
  %967 = vmatprep.subr.mxu0 0.0
  %968 = vmatpush2.msra.mxu0 0.0
  %969 = vmatprep.subr.mxu0 0.0
  %970 = vmatpush2.msra.mxu0 0.0
  %971 = vmatprep.mubr.f32.mxu0 0.0
  %972 = vmatmul.mubr.f32.gmra.mxu0 %v896
  %v973 = vpop.f32.mrf.mxu0
  %v974 = vadd.f32 %v891, %v973
  %v975 = vpop.f32.mrf.mxu0
  %976 = vmatprep.mubr.f32.mxu0 0.0
  %977 = vmatmul.mubr.f32.gmra.mxu0 %v899
  %v978 = vpop.f32.mrf.mxu0
  %v979 = vadd.f32 %v892, %v978
  %v980 = vpop.f32.mrf.mxu0
  %981 = vmatprep.mubr.f32.mxu0 0.0
  %982 = vmatmul.mubr.f32.gmra.mxu0 %v902
  %v983 = vpop.f32.mrf.mxu0
  %v984 = vadd.f32 %v893, %v983
  %v985 = vpop.f32.mrf.mxu0
  %986 = vmatprep.mubr.f32.mxu0 0.0
  %987 = vmatmul.mubr.f32.gmra.mxu0 %v905
  %v988 = vpop.f32.mrf.mxu0
  %v989 = vadd.f32 %v894, %v988
  %v990 = vpop.f32.mrf.mxu0
  %991 = vdwg.mxu0
  %vm992 = vcmp.gt.f32.partialorder %v974, 0.0
  %vm993 = vcmp.gt.f32.partialorder %v979, 0.0
  %vm994 = vcmp.gt.f32.partialorder %v984, 0.0
  %vm995 = vcmp.gt.f32.partialorder %v989, 0.0
  %v996 = vmul.f32 %v974, 0.2
  %v997 = vmul.f32 %v979, 0.2
  %v998 = vmul.f32 %v984, 0.2
  %v999 = vmul.f32 %v989, 0.2
  %v1000 = vsel %vm992, %v974, %v996
  %v1001 = vsel %vm993, %v979, %v997
  %v1002 = vsel %vm994, %v984, %v998
  %v1003 = vsel %vm995, %v989, %v999
  %1004 = vst [vmem:[%s8] sm:$0xff] %v1000
  %1005 = vst [vmem:[%s8 + $0x8] sm:$0xff] %v1001
  %1006 = vst [vmem:[%s8 + $0x10] sm:$0xff] %v1002
  %1007 = vst [vmem:[%s8 + $0x18] sm:$0xff] %v1003
  // Predicated region
  $region34: #{resblock2d_forward.1} parent=0 // pred_check
    _
  $region35: #{resblock2d_forward.1} parent=0 // pred_check_branch
    %1009 = sbr.rel (0) target = $region37
  $region36: #{resblock2d_forward.1} parent=0 // pred_region
    _
  $region37: #{resblock2d_forward.1} parent=0 // pred_fallthru
    _
  // Predicated region
  $region38: #{resblock2d_forward.1} parent=0 // pred_check
    _
  $region39: #{resblock2d_forward.1} parent=0 // pred_check_branch
    %1011 = sbr.rel (0) target = $region41
  $region40: #{resblock2d_forward.1} parent=0 // pred_region
    _
  $region41: #{resblock2d_forward.1} parent=0 // pred_fallthru
    _

</llo_original>
